<compile_context>
chip_gen: v7x
topology: tpu7x:2x2x1
jax: 0.10.0
libtpu: 0.0.40
codegen_flags: <defaults>
</compile_context>

<pallas_src>
import functools
import math

import jax
import jax.numpy as jnp
from jax.experimental import pallas as pl
from jax.experimental.pallas import tpu as pltpu


def _fused_mlp_kernel(*refs, num_layers, eps, mxu_dtype, inv_cnt):
    """refs = (x_ref, [sum_l, bcast, P] (if num_layers > 1),
               per-layer [w, b (, gamma, beta)], o_ref).

    x_ref : (C_in, Nb*L)  lane-dense activation block (batch folded into lanes,
                          sample-major with L contiguous)
    o_ref : (C_out, Nb*L)
    """
    f32 = jnp.float32
    if num_layers > 1:
        x_ref, sum_l_ref, bcast_ref, p_ref = refs[:4]
        layer_refs = refs[4:-1]
        sum_l = sum_l_ref[...].astype(f32)   # (Nb*L, Nb): y @ sum_l == per-sample sum over L
        bcast = bcast_ref[...].astype(f32)   # (Nb, Nb*L): a @ bcast == per-sample broadcast
        P = p_ref[...].astype(f32)           # (K, K)    : group-membership matrix
    else:
        x_ref = refs[0]
        layer_refs = refs[1:-1]
    o_ref = refs[-1]

    cur = x_ref[...].astype(mxu_dtype)       # activation stays in VMEM across layers

    ptr = 0
    for i in range(num_layers):
        has_norm = i < num_layers - 1
        w = layer_refs[ptr][...].astype(mxu_dtype)            # (K, C)
        b = layer_refs[ptr + 1][...].astype(f32)              # (K, 1)

        # Conv1d(kernel_size=1) == channel matmul on the MXU (f32 accumulate).
        y = jnp.dot(w, cur, preferred_element_type=f32) + b   # (K, Nb*L) f32

        if has_norm:
            gamma = layer_refs[ptr + 2][...].astype(f32)      # (K, 1)
            beta = layer_refs[ptr + 3][...].astype(f32)       # (K, 1)
            ptr += 4

            # GroupNorm stats in f32: per-sample sum over L via the resident
            # 0/1 matrix (MXU), then per-group channel sum via tiny P matmul.
            s = jnp.dot(y, sum_l, preferred_element_type=f32)        # (K, Nb)
            ss = jnp.dot(y * y, sum_l, preferred_element_type=f32)   # (K, Nb)
            mean = jnp.dot(P, s, preferred_element_type=f32) * inv_cnt
            meansq = jnp.dot(P, ss, preferred_element_type=f32) * inv_cnt
            var = jnp.maximum(meansq - mean * mean, 0.0)      # single-pass var, clamped
            inv = jax.lax.rsqrt(var + eps)                    # (K, Nb)

            # Fold GN affine into one scale/shift per (channel, sample),
            # broadcast back over L via the resident 0/1 matrix, apply, ReLU.
            scale = inv * gamma                               # (K, Nb)
            shift = beta - mean * scale                       # (K, Nb)
            y = (y * jnp.dot(scale, bcast, preferred_element_type=f32)
                 + jnp.dot(shift, bcast, preferred_element_type=f32))
            y = jnp.maximum(y, 0.0)
            # Carry the inter-layer activation in mxu_dtype: its only consumer
            # is the next matmul's cast -> identical numerics, half the bytes.
            cur = y.astype(mxu_dtype)
        else:
            ptr += 2
            cur = y

    o_ref[...] = cur.astype(o_ref.dtype)


def _vmem_capacity_bytes():
    try:
        cap = getattr(pltpu.get_tpu_info(), "vmem_capacity_bytes", None)
        if cap:
            return int(cap)
    except Exception:
        pass
    return 64 * 1024 * 1024          # conservative default (v7x per-core VMEM)


def _choose_batch_tile(n, l, c_max, in_itemsize, vmem_budget, const_cap):
    """Largest batch tile Nb such that
       * (Nb * L) is a multiple of 128              (lane-dense, unmasked stores)
       * the per-step working set fits vmem_budget  (derived from the chip's VMEM)
       * each (Nb*L, Nb) GroupNorm constant stays <= const_cap (quadratic term)
       * the grid keeps >= 2 steps whenever the padded batch allows it (v7x megacore)
    Returns (Nb, n_tiles)."""
    nb_unit = 128 // math.gcd(l, 128)          # smallest Nb with (Nb*L) % 128 == 0
    units_total = -(-n // nb_unit)             # padded batch size measured in units

    def fits(nb):
        w = nb * l
        live = 6 * c_max * w * 4               # live f32 intermediates in the GN epilogue
        consts = 2 * 4 * nb * w                # sum_l + bcast (f32), resident
        io = 2 * c_max * w * (in_itemsize + 4)  # double-buffered input/output blocks
        return (live + consts + io) <= vmem_budget and (4 * nb * w) <= const_cap

    # keep >= 2 grid steps when possible so both v7x TensorCores get work
    units = units_total if units_total < 2 else -(-units_total // 2)
    while units > 1 and not fits(units * nb_unit):
        units = -(-units // 2)
    units = max(units, 1)
    nb = units * nb_unit
    n_tiles = -(-units_total // units)
    return nb, n_tiles


def mlp_forward(x, params, group_counts, num_layers, *, eps=1e-5,
                mxu_dtype=jnp.bfloat16):
    """Whole MLP in one fused Pallas call.  x: (N, C_in, L) -> (N, C_out, L)."""
    N, C_in, L = x.shape
    C_out = params[-1][0].shape[0]

    # GroupNorm i is sized by layer i's INPUT channels but applied to its
    # OUTPUT -> only valid when input_dim == hidden_dim (as in the module).
    K_norm, G_norm = None, None
    for i in range(num_layers - 1):
        w_i, gamma_i = params[i][0], params[i][2]
        K_i = w_i.shape[0]
        assert K_i == w_i.shape[1], "module requires input_dim == hidden_dim"
        assert gamma_i.shape[0] == K_i and K_i % int(group_counts[i]) == 0
        if K_norm is None:
            K_norm, G_norm = K_i, int(group_counts[i])
        assert (K_i, int(group_counts[i])) == (K_norm, G_norm)

    c_max = max(C_in, C_out, *(layer[0].shape[0] for layer in params))
    in_itemsize = jnp.dtype(mxu_dtype).itemsize

    vmem_phys = _vmem_capacity_bytes()
    Nb, n_tiles = _choose_batch_tile(
        N, L, c_max, in_itemsize,
        vmem_budget=vmem_phys // 2,            # headroom under the compiler limit
        const_cap=8 * 1024 * 1024)
    N_pad = Nb * n_tiles

    # Zero-pad the batch so the folded lane axis is a multiple of 128 and
    # divides evenly into tiles (padded samples are sliced off afterwards).
    if N_pad != N:
        x = jnp.pad(x, ((0, N_pad - N), (0, 0), (0, 0)))

    # NCL -> lane-dense (C, N*L) (sample-major, L contiguous), fused with the
    # mxu_dtype cast so the relayout is one pass and the kernel input DMA is
    # halved on the bf16 path.
    # TODO(synk): accept/produce the (C, N*L) layout upstream to drop this pass.
    x_flat = jnp.transpose(x, (1, 0, 2)).reshape(C_in, N_pad * L).astype(mxu_dtype)

    inputs = [x_flat]
    in_specs = [pl.BlockSpec((C_in, Nb * L), lambda t: (0, t))]

    inv_cnt = 1.0
    if num_layers > 1:
        # Resident 0/1 constants: constant index_map => DMA'd once and reused
        # by every grid step (not rebuilt per step inside the kernel).
        # Layout invariant: lane axis is sample-major with L contiguous.
        nbl = Nb * L
        j = jax.lax.broadcasted_iota(jnp.int32, (nbl, Nb), 0) // L
        n_ = jax.lax.broadcasted_iota(jnp.int32, (nbl, Nb), 1)
        sum_l = (j == n_).astype(jnp.float32)       # (Nb*L, Nb)
        bcast = sum_l.T                             # (Nb, Nb*L)
        gs = K_norm // G_norm                       # channels per group
        r = jax.lax.broadcasted_iota(jnp.int32, (K_norm, K_norm), 0) // gs
        c = jax.lax.broadcasted_iota(jnp.int32, (K_norm, K_norm), 1) // gs
        P = (r == c).astype(jnp.float32)            # (K, K)
        inputs += [sum_l, bcast, P]
        in_specs += [pl.BlockSpec(sum_l.shape, lambda t: (0, 0)),
                     pl.BlockSpec(bcast.shape, lambda t: (0, 0)),
                     pl.BlockSpec(P.shape, lambda t: (0, 0))]
        inv_cnt = 1.0 / float(gs * L)

    for i, layer in enumerate(params):
        w, b = layer[0].astype(mxu_dtype), layer[1]
        inputs += [w, b]
        in_specs += [pl.BlockSpec(w.shape, lambda t: (0, 0)),
                     pl.BlockSpec(b.shape, lambda t: (0, 0))]
        if i < num_layers - 1:
            gamma, beta = layer[2], layer[3]
            inputs += [gamma, beta]
            in_specs += [pl.BlockSpec(gamma.shape, lambda t: (0, 0)),
                         pl.BlockSpec(beta.shape, lambda t: (0, 0))]

    kernel = functools.partial(
        _fused_mlp_kernel,
        num_layers=num_layers, eps=eps, mxu_dtype=mxu_dtype, inv_cnt=inv_cnt)

    # Advisory cost estimate so XLA schedules sensibly around the custom call.
    flops = 0
    transcendentals = 0
    for i, layer in enumerate(params):
        K_i, C_i = layer[0].shape
        flops += 2 * K_i * C_i * N_pad * L                 # conv matmul
        if i < num_layers - 1:
            flops += 8 * K_i * Nb * N_pad * L              # GN stats + broadcast matmuls
            flops += 8 * K_i * N_pad * L                   # GN/ReLU elementwise (rough)
            transcendentals += K_i * N_pad                 # rsqrt
    bytes_accessed = (x_flat.size * x_flat.dtype.itemsize
                      + C_out * N_pad * L * x.dtype.itemsize
                      + sum(int(a.size) * a.dtype.itemsize for a in inputs[1:]))

    vmem_limit = int(vmem_phys * 3 // 4)

    out_flat = pl.pallas_call(
        kernel,
        out_shape=jax.ShapeDtypeStruct((C_out, N_pad * L), x.dtype),
        grid=(n_tiles,),
        in_specs=in_specs,
        out_specs=pl.BlockSpec((C_out, Nb * L), lambda t: (0, t)),
        compiler_params=pltpu.CompilerParams(
            dimension_semantics=("parallel",),
            vmem_limit_bytes=vmem_limit),
        cost_estimate=pl.CostEstimate(
            flops=int(flops),
            transcendentals=int(transcendentals),
            bytes_accessed=int(bytes_accessed)),
    )(*inputs)

    # (C_out, N_pad*L) -> (N, C_out, L), dropping padded samples.
    out = jnp.transpose(out_flat.reshape(C_out, N_pad, L), (1, 0, 2))
    return out[:N] if N_pad != N else out


def mlp_reference(x, params, group_counts, num_layers, eps=1e-5,
                  mxu_dtype=jnp.float32):
    """Pure-JAX reference reproducing the PyTorch forward (optionally with the
    same bf16 matmul-operand cast / f32 accumulation as the kernel)."""
    y = x
    for i, layer in enumerate(params):
        w, b = layer[0], layer[1]
        y = jnp.einsum("kc,ncl->nkl", w.astype(mxu_dtype), y.astype(mxu_dtype),
                       preferred_element_type=jnp.float32) + b[None]
        if i < num_layers - 1:
            gamma, beta = layer[2], layer[3]
            n, k, l = y.shape
            G = int(group_counts[i])
            g = y.reshape(n, G, (k // G) * l)
            mean = g.mean(axis=-1, keepdims=True)
            var = ((g - mean) ** 2).mean(axis=-1, keepdims=True)
            g = (g - mean) * jax.lax.rsqrt(var + eps)
            y = g.reshape(n, k, l) * gamma[None] + beta[None]
            y = jnp.maximum(y, 0.0)
    return y


if __name__ == "__main__":
    key = jax.random.PRNGKey(0)

    # Reference module requires input_dim == hidden_dim (see NOTE above).
    input_dim = 32
    hidden_dim = 32
    output_dim = 16
    num_layers = 3
    N, L = 2, 16

    dims = [input_dim] + [hidden_dim] * (num_layers - 1) + [output_dim]
    # GroupNorm(c // 2, c) with c = layer-input channel count, as in the module.
    group_counts = [dims[i] // 2 for i in range(num_layers)]

    params = []
    for i in range(num_layers):
        key, kw, kb, kg, kbt = jax.random.split(key, 5)
        c_in, c_out = dims[i], dims[i + 1]
        w = jax.random.normal(kw, (c_out, c_in), jnp.float32) / jnp.sqrt(c_in)
        b = 0.1 * jax.random.normal(kb, (c_out, 1), jnp.float32)
        if i < num_layers - 1:
            gamma = 1.0 + 0.1 * jax.random.normal(kg, (c_out, 1), jnp.float32)
            beta = 0.1 * jax.random.normal(kbt, (c_out, 1), jnp.float32)
            params.append((w, b, gamma, beta))
        else:
            params.append((w, b))

    key, kx = jax.random.split(key)
    x = jax.random.normal(kx, (N, input_dim, L), jnp.float32)

    # Default (bf16 MXU operands, f32 stats/accumulation) vs matching-cast ref.
    out = jax.block_until_ready(mlp_forward(x, params, group_counts, num_layers))
    ref = mlp_reference(x, params, group_counts, num_layers,
                        mxu_dtype=jnp.bfloat16)
    assert out.shape == (N, output_dim, L)
    assert jnp.allclose(out, ref, atol=1e-2, rtol=1e-2), "bf16 path mismatch"

    # Exact f32 path vs f32 reference.
    out32 = jax.block_until_ready(
        mlp_forward(x, params, group_counts, num_layers,
                    mxu_dtype=jnp.float32))
    ref32 = mlp_reference(x, params, group_counts, num_layers,
                          mxu_dtype=jnp.float32)
    assert jnp.allclose(out32, ref32, atol=1e-3, rtol=1e-3), "f32 path mismatch"

    # Larger batch: exercises zero-padding, multi-tile grid and the megacore
    # (n_tiles >= 2) split.
    N2 = 40
    key, kx2 = jax.random.split(key)
    x2 = jax.random.normal(kx2, (N2, input_dim, L), jnp.float32)
    out2 = jax.block_until_ready(
        mlp_forward(x2, params, group_counts, num_layers))
    ref2 = mlp_reference(x2, params, group_counts, num_layers,
                         mxu_dtype=jnp.bfloat16)
    assert out2.shape == (N2, output_dim, L)
    assert jnp.allclose(out2, ref2, atol=1e-2, rtol=1e-2), "multi-tile mismatch"

    print("KERNEL_OK")
</pallas_src>

<mosaic_0001>
module attributes {stable_mosaic.version = 11 : i64} {
  func.func @_fused_mlp_kernel(%arg0: i32, %arg1: memref<32x128xbf16, #tpu.memory_space<vmem>>, %arg2: memref<128x8xf32, #tpu.memory_space<vmem>>, %arg3: memref<8x128xf32, #tpu.memory_space<vmem>>, %arg4: memref<32x32xf32, #tpu.memory_space<vmem>>, %arg5: memref<32x32xbf16, #tpu.memory_space<vmem>>, %arg6: memref<32x1xf32, #tpu.memory_space<vmem>>, %arg7: memref<32x1xf32, #tpu.memory_space<vmem>>, %arg8: memref<32x1xf32, #tpu.memory_space<vmem>>, %arg9: memref<32x32xbf16, #tpu.memory_space<vmem>>, %arg10: memref<32x1xf32, #tpu.memory_space<vmem>>, %arg11: memref<32x1xf32, #tpu.memory_space<vmem>>, %arg12: memref<32x1xf32, #tpu.memory_space<vmem>>, %arg13: memref<16x32xbf16, #tpu.memory_space<vmem>>, %arg14: memref<16x1xf32, #tpu.memory_space<vmem>>, %arg15: memref<16x128xf32, #tpu.memory_space<vmem>>) attributes {dimension_semantics = [#tpu.dimension_semantics<parallel>], iteration_bounds = array<i64: 1>, scalar_prefetch = 0 : i64, scratch_operands = 0 : i64, tpu.core_type = #tpu.core_type<tc>, window_params = [{transform_indices = @transform_0, window_bounds = array<i64: 32, 128>}, {pipeline_mode = #tpu.pipeline_mode<synchronous>, transform_indices = @transform_1, window_bounds = array<i64: 128, 8>}, {pipeline_mode = #tpu.pipeline_mode<synchronous>, transform_indices = @transform_2, window_bounds = array<i64: 8, 128>}, {pipeline_mode = #tpu.pipeline_mode<synchronous>, transform_indices = @transform_3, window_bounds = array<i64: 32, 32>}, {pipeline_mode = #tpu.pipeline_mode<synchronous>, transform_indices = @transform_4, window_bounds = array<i64: 32, 32>}, {pipeline_mode = #tpu.pipeline_mode<synchronous>, transform_indices = @transform_5, window_bounds = array<i64: 32, 1>}, {pipeline_mode = #tpu.pipeline_mode<synchronous>, transform_indices = @transform_6, window_bounds = array<i64: 32, 1>}, {pipeline_mode = #tpu.pipeline_mode<synchronous>, transform_indices = @transform_7, window_bounds = array<i64: 32, 1>}, {pipeline_mode = #tpu.pipeline_mode<synchronous>, transform_indices = @transform_8, window_bounds = array<i64: 32, 32>}, {pipeline_mode = #tpu.pipeline_mode<synchronous>, transform_indices = @transform_9, window_bounds = array<i64: 32, 1>}, {pipeline_mode = #tpu.pipeline_mode<synchronous>, transform_indices = @transform_10, window_bounds = array<i64: 32, 1>}, {pipeline_mode = #tpu.pipeline_mode<synchronous>, transform_indices = @transform_11, window_bounds = array<i64: 32, 1>}, {pipeline_mode = #tpu.pipeline_mode<synchronous>, transform_indices = @transform_12, window_bounds = array<i64: 16, 32>}, {pipeline_mode = #tpu.pipeline_mode<synchronous>, transform_indices = @transform_13, window_bounds = array<i64: 16, 1>}, {transform_indices = @transform_14, window_bounds = array<i64: 16, 128>}]} {
    %c0 = arith.constant 0 : index
    %c0_0 = arith.constant 0 : index
    %0 = vector.load %arg2[%c0, %c0_0] : memref<128x8xf32, #tpu.memory_space<vmem>>, vector<128x8xf32>
    %c0_1 = arith.constant 0 : index
    %c0_2 = arith.constant 0 : index
    %1 = vector.load %arg3[%c0_1, %c0_2] : memref<8x128xf32, #tpu.memory_space<vmem>>, vector<8x128xf32>
    %c0_3 = arith.constant 0 : index
    %c0_4 = arith.constant 0 : index
    %2 = vector.load %arg4[%c0_3, %c0_4] : memref<32x32xf32, #tpu.memory_space<vmem>>, vector<32x32xf32>
    %c0_5 = arith.constant 0 : index
    %c0_6 = arith.constant 0 : index
    %3 = vector.load %arg1[%c0_5, %c0_6] : memref<32x128xbf16, #tpu.memory_space<vmem>>, vector<32x128xbf16>
    %c0_7 = arith.constant 0 : index
    %c0_8 = arith.constant 0 : index
    %4 = vector.load %arg5[%c0_7, %c0_8] : memref<32x32xbf16, #tpu.memory_space<vmem>>, vector<32x32xbf16>
    %c0_9 = arith.constant 0 : index
    %c0_10 = arith.constant 0 : index
    %5 = vector.load %arg6[%c0_9, %c0_10] : memref<32x1xf32, #tpu.memory_space<vmem>>, vector<32x1xf32>
    %cst = arith.constant dense<0.000000e+00> : vector<32x128xf32>
    %6 = tpu.matmul %4, %3, %cst {dimension_numbers = #tpu.dot_dimension_numbers<[1], [0], [0], [1], [0, 0, 1, 1], [], []>} : vector<32x32xbf16>, vector<32x128xbf16>, vector<32x128xf32> -> vector<32x128xf32>
    %7 = vector.broadcast %5 : vector<32x1xf32> to vector<32x128xf32>
    %8 = arith.addf %6, %7 : vector<32x128xf32>
    %c0_11 = arith.constant 0 : index
    %c0_12 = arith.constant 0 : index
    %9 = vector.load %arg7[%c0_11, %c0_12] : memref<32x1xf32, #tpu.memory_space<vmem>>, vector<32x1xf32>
    %c0_13 = arith.constant 0 : index
    %c0_14 = arith.constant 0 : index
    %10 = vector.load %arg8[%c0_13, %c0_14] : memref<32x1xf32, #tpu.memory_space<vmem>>, vector<32x1xf32>
    %cst_15 = arith.constant dense<0.000000e+00> : vector<32x8xf32>
    %11 = tpu.matmul %8, %0, %cst_15 {dimension_numbers = #tpu.dot_dimension_numbers<[1], [0], [0], [1], [0, 0, 1, 1], [], []>} : vector<32x128xf32>, vector<128x8xf32>, vector<32x8xf32> -> vector<32x8xf32>
    %12 = arith.mulf %8, %8 : vector<32x128xf32>
    %cst_16 = arith.constant dense<0.000000e+00> : vector<32x8xf32>
    %13 = tpu.matmul %12, %0, %cst_16 {dimension_numbers = #tpu.dot_dimension_numbers<[1], [0], [0], [1], [0, 0, 1, 1], [], []>} : vector<32x128xf32>, vector<128x8xf32>, vector<32x8xf32> -> vector<32x8xf32>
    %cst_17 = arith.constant dense<0.000000e+00> : vector<32x8xf32>
    %14 = tpu.matmul %2, %11, %cst_17 {dimension_numbers = #tpu.dot_dimension_numbers<[1], [0], [0], [1], [0, 0, 1, 1], [], []>} : vector<32x32xf32>, vector<32x8xf32>, vector<32x8xf32> -> vector<32x8xf32>
    %cst_18 = arith.constant 3.125000e-02 : f32
    %15 = vector.broadcast %cst_18 : f32 to vector<32x8xf32>
    %16 = arith.mulf %14, %15 : vector<32x8xf32>
    %cst_19 = arith.constant dense<0.000000e+00> : vector<32x8xf32>
    %17 = tpu.matmul %2, %13, %cst_19 {dimension_numbers = #tpu.dot_dimension_numbers<[1], [0], [0], [1], [0, 0, 1, 1], [], []>} : vector<32x32xf32>, vector<32x8xf32>, vector<32x8xf32> -> vector<32x8xf32>
    %cst_20 = arith.constant 3.125000e-02 : f32
    %18 = vector.broadcast %cst_20 : f32 to vector<32x8xf32>
    %19 = arith.mulf %17, %18 : vector<32x8xf32>
    %20 = arith.mulf %16, %16 : vector<32x8xf32>
    %21 = arith.subf %19, %20 : vector<32x8xf32>
    %cst_21 = arith.constant 0.000000e+00 : f32
    %22 = vector.broadcast %cst_21 : f32 to vector<32x8xf32>
    %23 = arith.maximumf %21, %22 : vector<32x8xf32>
    %cst_22 = arith.constant 9.99999974E-6 : f32
    %24 = vector.broadcast %cst_22 : f32 to vector<32x8xf32>
    %25 = arith.addf %23, %24 : vector<32x8xf32>
    %26 = math.rsqrt %25 : vector<32x8xf32>
    %27 = vector.broadcast %9 : vector<32x1xf32> to vector<32x8xf32>
    %28 = arith.mulf %26, %27 : vector<32x8xf32>
    %29 = arith.mulf %16, %28 : vector<32x8xf32>
    %30 = vector.broadcast %10 : vector<32x1xf32> to vector<32x8xf32>
    %31 = arith.subf %30, %29 : vector<32x8xf32>
    %cst_23 = arith.constant dense<0.000000e+00> : vector<32x128xf32>
    %32 = tpu.matmul %28, %1, %cst_23 {dimension_numbers = #tpu.dot_dimension_numbers<[1], [0], [0], [1], [0, 0, 1, 1], [], []>} : vector<32x8xf32>, vector<8x128xf32>, vector<32x128xf32> -> vector<32x128xf32>
    %33 = arith.mulf %8, %32 : vector<32x128xf32>
    %cst_24 = arith.constant dense<0.000000e+00> : vector<32x128xf32>
    %34 = tpu.matmul %31, %1, %cst_24 {dimension_numbers = #tpu.dot_dimension_numbers<[1], [0], [0], [1], [0, 0, 1, 1], [], []>} : vector<32x8xf32>, vector<8x128xf32>, vector<32x128xf32> -> vector<32x128xf32>
    %35 = arith.addf %33, %34 : vector<32x128xf32>
    %cst_25 = arith.constant 0.000000e+00 : f32
    %36 = vector.broadcast %cst_25 : f32 to vector<32x128xf32>
    %37 = arith.maximumf %35, %36 : vector<32x128xf32>
    %38 = arith.truncf %37 : vector<32x128xf32> to vector<32x128xbf16>
    %c0_26 = arith.constant 0 : index
    %c0_27 = arith.constant 0 : index
    %39 = vector.load %arg9[%c0_26, %c0_27] : memref<32x32xbf16, #tpu.memory_space<vmem>>, vector<32x32xbf16>
    %c0_28 = arith.constant 0 : index
    %c0_29 = arith.constant 0 : index
    %40 = vector.load %arg10[%c0_28, %c0_29] : memref<32x1xf32, #tpu.memory_space<vmem>>, vector<32x1xf32>
    %cst_30 = arith.constant dense<0.000000e+00> : vector<32x128xf32>
    %41 = tpu.matmul %39, %38, %cst_30 {dimension_numbers = #tpu.dot_dimension_numbers<[1], [0], [0], [1], [0, 0, 1, 1], [], []>} : vector<32x32xbf16>, vector<32x128xbf16>, vector<32x128xf32> -> vector<32x128xf32>
    %42 = vector.broadcast %40 : vector<32x1xf32> to vector<32x128xf32>
    %43 = arith.addf %41, %42 : vector<32x128xf32>
    %c0_31 = arith.constant 0 : index
    %c0_32 = arith.constant 0 : index
    %44 = vector.load %arg11[%c0_31, %c0_32] : memref<32x1xf32, #tpu.memory_space<vmem>>, vector<32x1xf32>
    %c0_33 = arith.constant 0 : index
    %c0_34 = arith.constant 0 : index
    %45 = vector.load %arg12[%c0_33, %c0_34] : memref<32x1xf32, #tpu.memory_space<vmem>>, vector<32x1xf32>
    %cst_35 = arith.constant dense<0.000000e+00> : vector<32x8xf32>
    %46 = tpu.matmul %43, %0, %cst_35 {dimension_numbers = #tpu.dot_dimension_numbers<[1], [0], [0], [1], [0, 0, 1, 1], [], []>} : vector<32x128xf32>, vector<128x8xf32>, vector<32x8xf32> -> vector<32x8xf32>
    %47 = arith.mulf %43, %43 : vector<32x128xf32>
    %cst_36 = arith.constant dense<0.000000e+00> : vector<32x8xf32>
    %48 = tpu.matmul %47, %0, %cst_36 {dimension_numbers = #tpu.dot_dimension_numbers<[1], [0], [0], [1], [0, 0, 1, 1], [], []>} : vector<32x128xf32>, vector<128x8xf32>, vector<32x8xf32> -> vector<32x8xf32>
    %cst_37 = arith.constant dense<0.000000e+00> : vector<32x8xf32>
    %49 = tpu.matmul %2, %46, %cst_37 {dimension_numbers = #tpu.dot_dimension_numbers<[1], [0], [0], [1], [0, 0, 1, 1], [], []>} : vector<32x32xf32>, vector<32x8xf32>, vector<32x8xf32> -> vector<32x8xf32>
    %cst_38 = arith.constant 3.125000e-02 : f32
    %50 = vector.broadcast %cst_38 : f32 to vector<32x8xf32>
    %51 = arith.mulf %49, %50 : vector<32x8xf32>
    %cst_39 = arith.constant dense<0.000000e+00> : vector<32x8xf32>
    %52 = tpu.matmul %2, %48, %cst_39 {dimension_numbers = #tpu.dot_dimension_numbers<[1], [0], [0], [1], [0, 0, 1, 1], [], []>} : vector<32x32xf32>, vector<32x8xf32>, vector<32x8xf32> -> vector<32x8xf32>
    %cst_40 = arith.constant 3.125000e-02 : f32
    %53 = vector.broadcast %cst_40 : f32 to vector<32x8xf32>
    %54 = arith.mulf %52, %53 : vector<32x8xf32>
    %55 = arith.mulf %51, %51 : vector<32x8xf32>
    %56 = arith.subf %54, %55 : vector<32x8xf32>
    %cst_41 = arith.constant 0.000000e+00 : f32
    %57 = vector.broadcast %cst_41 : f32 to vector<32x8xf32>
    %58 = arith.maximumf %56, %57 : vector<32x8xf32>
    %cst_42 = arith.constant 9.99999974E-6 : f32
    %59 = vector.broadcast %cst_42 : f32 to vector<32x8xf32>
    %60 = arith.addf %58, %59 : vector<32x8xf32>
    %61 = math.rsqrt %60 : vector<32x8xf32>
    %62 = vector.broadcast %44 : vector<32x1xf32> to vector<32x8xf32>
    %63 = arith.mulf %61, %62 : vector<32x8xf32>
    %64 = arith.mulf %51, %63 : vector<32x8xf32>
    %65 = vector.broadcast %45 : vector<32x1xf32> to vector<32x8xf32>
    %66 = arith.subf %65, %64 : vector<32x8xf32>
    %cst_43 = arith.constant dense<0.000000e+00> : vector<32x128xf32>
    %67 = tpu.matmul %63, %1, %cst_43 {dimension_numbers = #tpu.dot_dimension_numbers<[1], [0], [0], [1], [0, 0, 1, 1], [], []>} : vector<32x8xf32>, vector<8x128xf32>, vector<32x128xf32> -> vector<32x128xf32>
    %68 = arith.mulf %43, %67 : vector<32x128xf32>
    %cst_44 = arith.constant dense<0.000000e+00> : vector<32x128xf32>
    %69 = tpu.matmul %66, %1, %cst_44 {dimension_numbers = #tpu.dot_dimension_numbers<[1], [0], [0], [1], [0, 0, 1, 1], [], []>} : vector<32x8xf32>, vector<8x128xf32>, vector<32x128xf32> -> vector<32x128xf32>
    %70 = arith.addf %68, %69 : vector<32x128xf32>
    %cst_45 = arith.constant 0.000000e+00 : f32
    %71 = vector.broadcast %cst_45 : f32 to vector<32x128xf32>
    %72 = arith.maximumf %70, %71 : vector<32x128xf32>
    %73 = arith.truncf %72 : vector<32x128xf32> to vector<32x128xbf16>
    %c0_46 = arith.constant 0 : index
    %c0_47 = arith.constant 0 : index
    %74 = vector.load %arg13[%c0_46, %c0_47] : memref<16x32xbf16, #tpu.memory_space<vmem>>, vector<16x32xbf16>
    %c0_48 = arith.constant 0 : index
    %c0_49 = arith.constant 0 : index
    %75 = vector.load %arg14[%c0_48, %c0_49] : memref<16x1xf32, #tpu.memory_space<vmem>>, vector<16x1xf32>
    %cst_50 = arith.constant dense<0.000000e+00> : vector<16x128xf32>
    %76 = tpu.matmul %74, %73, %cst_50 {dimension_numbers = #tpu.dot_dimension_numbers<[1], [0], [0], [1], [0, 0, 1, 1], [], []>} : vector<16x32xbf16>, vector<32x128xbf16>, vector<16x128xf32> -> vector<16x128xf32>
    %77 = vector.broadcast %75 : vector<16x1xf32> to vector<16x128xf32>
    %78 = arith.addf %76, %77 : vector<16x128xf32>
    %c0_51 = arith.constant 0 : index
    %c0_52 = arith.constant 0 : index
    %79 = vector.load %arg15[%c0_51, %c0_52] : memref<16x128xf32, #tpu.memory_space<vmem>>, vector<16x128xf32>
    tpu.vector_store %arg15[%c0_51, %c0_52], %78 {strides = array<i32>} : memref<16x128xf32, #tpu.memory_space<vmem>>, vector<16x128xf32>,
    return
  }
  func.func @transform_0(%arg0: i32) -> (i32, i32) {
    %c0_i32 = arith.constant 0 : i32
    %c0_i32_0 = arith.constant 0 : i32
    return %c0_i32, %arg0 : i32, i32
  }
  func.func @transform_1(%arg0: i32) -> (i32, i32) {
    %c0_i32 = arith.constant 0 : i32
    %c0_i32_0 = arith.constant 0 : i32
    %c0_i32_1 = arith.constant 0 : i32
    return %c0_i32, %c0_i32_0 : i32, i32
  }
  func.func @transform_2(%arg0: i32) -> (i32, i32) {
    %c0_i32 = arith.constant 0 : i32
    %c0_i32_0 = arith.constant 0 : i32
    %c0_i32_1 = arith.constant 0 : i32
    return %c0_i32, %c0_i32_0 : i32, i32
  }
  func.func @transform_3(%arg0: i32) -> (i32, i32) {
    %c0_i32 = arith.constant 0 : i32
    %c0_i32_0 = arith.constant 0 : i32
    %c0_i32_1 = arith.constant 0 : i32
    return %c0_i32, %c0_i32_0 : i32, i32
  }
  func.func @transform_4(%arg0: i32) -> (i32, i32) {
    %c0_i32 = arith.constant 0 : i32
    %c0_i32_0 = arith.constant 0 : i32
    %c0_i32_1 = arith.constant 0 : i32
    return %c0_i32, %c0_i32_0 : i32, i32
  }
  func.func @transform_5(%arg0: i32) -> (i32, i32) {
    %c0_i32 = arith.constant 0 : i32
    %c0_i32_0 = arith.constant 0 : i32
    %c0_i32_1 = arith.constant 0 : i32
    return %c0_i32, %c0_i32_0 : i32, i32
  }
  func.func @transform_6(%arg0: i32) -> (i32, i32) {
    %c0_i32 = arith.constant 0 : i32
    %c0_i32_0 = arith.constant 0 : i32
    %c0_i32_1 = arith.constant 0 : i32
    return %c0_i32, %c0_i32_0 : i32, i32
  }
  func.func @transform_7(%arg0: i32) -> (i32, i32) {
    %c0_i32 = arith.constant 0 : i32
    %c0_i32_0 = arith.constant 0 : i32
    %c0_i32_1 = arith.constant 0 : i32
    return %c0_i32, %c0_i32_0 : i32, i32
  }
  func.func @transform_8(%arg0: i32) -> (i32, i32) {
    %c0_i32 = arith.constant 0 : i32
    %c0_i32_0 = arith.constant 0 : i32
    %c0_i32_1 = arith.constant 0 : i32
    return %c0_i32, %c0_i32_0 : i32, i32
  }
  func.func @transform_9(%arg0: i32) -> (i32, i32) {
    %c0_i32 = arith.constant 0 : i32
    %c0_i32_0 = arith.constant 0 : i32
    %c0_i32_1 = arith.constant 0 : i32
    return %c0_i32, %c0_i32_0 : i32, i32
  }
  func.func @transform_10(%arg0: i32) -> (i32, i32) {
    %c0_i32 = arith.constant 0 : i32
    %c0_i32_0 = arith.constant 0 : i32
    %c0_i32_1 = arith.constant 0 : i32
    return %c0_i32, %c0_i32_0 : i32, i32
  }
  func.func @transform_11(%arg0: i32) -> (i32, i32) {
    %c0_i32 = arith.constant 0 : i32
    %c0_i32_0 = arith.constant 0 : i32
    %c0_i32_1 = arith.constant 0 : i32
    return %c0_i32, %c0_i32_0 : i32, i32
  }
  func.func @transform_12(%arg0: i32) -> (i32, i32) {
    %c0_i32 = arith.constant 0 : i32
    %c0_i32_0 = arith.constant 0 : i32
    %c0_i32_1 = arith.constant 0 : i32
    return %c0_i32, %c0_i32_0 : i32, i32
  }
  func.func @transform_13(%arg0: i32) -> (i32, i32) {
    %c0_i32 = arith.constant 0 : i32
    %c0_i32_0 = arith.constant 0 : i32
    %c0_i32_1 = arith.constant 0 : i32
    return %c0_i32, %c0_i32_0 : i32, i32
  }
  func.func @transform_14(%arg0: i32) -> (i32, i32) {
    %c0_i32 = arith.constant 0 : i32
    %c0_i32_0 = arith.constant 0 : i32
    return %c0_i32, %arg0 : i32, i32
  }
}

</mosaic_0001>

<llo_original>
// kernel: tpu_custom_call.1
$region0: #{tpu_custom_call.1}
  #allocation0 [shape = 'u32[]', space=smem, size = 0x4, offset = 0x4, fixed_abs, tag = 'smem constant byte address 0x4 - core index']
  #allocation1 [shape = 'u32[144,128]{1,0:T(1,128)}', space=vmem, size = 0x12000, scoped, tag = 'internal scratch']
  %s0 = inlined_call_operand.vmem [shape: bf16[32,128], index: 0, kind: input, shape index: {}]
  %s1 = inlined_call_operand.vmem [shape: f32[128,8], index: 1, kind: input, shape index: {}]
  %s2 = inlined_call_operand.vmem [shape: f32[8,128], index: 2, kind: input, shape index: {}]
  %s3 = inlined_call_operand.vmem [shape: f32[32,32], index: 3, kind: input, shape index: {}]
  %s4 = inlined_call_operand.vmem [shape: bf16[32,32], index: 4, kind: input, shape index: {}]
  %s5 = inlined_call_operand.vmem [shape: f32[32,1], index: 5, kind: input, shape index: {}]
  %s6 = inlined_call_operand.vmem [shape: f32[32,1], index: 6, kind: input, shape index: {}]
  %s7 = inlined_call_operand.vmem [shape: f32[32,1], index: 7, kind: input, shape index: {}]
  %s8 = inlined_call_operand.vmem [shape: bf16[32,32], index: 8, kind: input, shape index: {}]
  %s9 = inlined_call_operand.vmem [shape: f32[32,1], index: 9, kind: input, shape index: {}]
  %s10 = inlined_call_operand.vmem [shape: f32[32,1], index: 10, kind: input, shape index: {}]
  %s11 = inlined_call_operand.vmem [shape: f32[32,1], index: 11, kind: input, shape index: {}]
  %s12 = inlined_call_operand.vmem [shape: bf16[16,32], index: 12, kind: input, shape index: {}]
  %s13 = inlined_call_operand.vmem [shape: f32[16,1], index: 13, kind: input, shape index: {}]
  %s14 = inlined_call_operand.hbm [shape: f32[16,128], index: 14, kind: output, shape index: {}]
  %s15 = sld [smem:[#allocation0]]
  $region66: #{tpu_custom_call.1} parent=0
    _
  %s17 = ssub.s32 1, %s15
  %s18 = scalar_select 0, %s17, %s15
  $region1: #{tpu_custom_call.1} parent=0
    #allocation2 [shape = 'u8[8192]{0}', space=vmem, size = 0x2000, scoped, tag = 'output window, operand 0, single buffered']
    #allocation3 [shape = 's32[1]{0}', space=sflag, size = 0x4, scoped, tag = 'scoped memory for tpu_custom_call.1']
    %19 = vsyncpa [#allocation3], 0
    // Predicated region
    $region2: #{tpu_custom_call.1} parent=1 // pred_check
      _
    $region3: #{tpu_custom_call.1} parent=1 // pred_check_branch
      %21 = sbr.rel (0) target = $region5
    $region4: #{tpu_custom_call.1} parent=1 // pred_region
      _
    $region5: #{tpu_custom_call.1} parent=1 // pred_fallthru
      _
    // Predicated region
    $region6: #{tpu_custom_call.1} parent=1 // pred_check
      _
    $region7: #{tpu_custom_call.1} parent=1 // pred_check_branch
      %23 = sbr.rel (0) target = $region9
    $region8: #{tpu_custom_call.1} parent=1 // pred_region
      _
    $region9: #{tpu_custom_call.1} parent=1 // pred_fallthru
      _
    // Predicated region
    $region10: #{tpu_custom_call.1} parent=1 // pred_check
      _
    $region11: #{tpu_custom_call.1} parent=1 // pred_check_branch
      %25 = sbr.rel (0) target = $region13
    $region12: #{tpu_custom_call.1} parent=1 // pred_region
      _
    $region13: #{tpu_custom_call.1} parent=1 // pred_fallthru
      _
    // Predicated region
    $region14: #{tpu_custom_call.1} parent=1 // pred_check
      _
    $region15: #{tpu_custom_call.1} parent=1 // pred_check_branch
      %27 = sbr.rel (0) target = $region17
    $region16: #{tpu_custom_call.1} parent=1 // pred_region
      _
    $region17: #{tpu_custom_call.1} parent=1 // pred_fallthru
      _
    // Predicated region
    $region18: #{tpu_custom_call.1} parent=1 // pred_check
      _
    $region19: #{tpu_custom_call.1} parent=1 // pred_check_branch
      %29 = sbr.rel (0) target = $region21
    $region20: #{tpu_custom_call.1} parent=1 // pred_region
      _
    $region21: #{tpu_custom_call.1} parent=1 // pred_fallthru
      _
    // Predicated region
    $region22: #{tpu_custom_call.1} parent=1 // pred_check
      _
    $region23: #{tpu_custom_call.1} parent=1 // pred_check_branch
      %31 = sbr.rel (0) target = $region25
    $region24: #{tpu_custom_call.1} parent=1 // pred_region
      _
    $region25: #{tpu_custom_call.1} parent=1 // pred_fallthru
      _
    // Predicated region
    $region26: #{tpu_custom_call.1} parent=1 // pred_check
      _
    $region27: #{tpu_custom_call.1} parent=1 // pred_check_branch
      %33 = sbr.rel (0) target = $region29
    $region28: #{tpu_custom_call.1} parent=1 // pred_region
      _
    $region29: #{tpu_custom_call.1} parent=1 // pred_fallthru
      _
    // Predicated region
    $region30: #{tpu_custom_call.1} parent=1 // pred_check
      _
    $region31: #{tpu_custom_call.1} parent=1 // pred_check_branch
      %35 = sbr.rel (0) target = $region33
    $region32: #{tpu_custom_call.1} parent=1 // pred_region
      _
    $region33: #{tpu_custom_call.1} parent=1 // pred_fallthru
      _
    // Predicated region
    $region34: #{tpu_custom_call.1} parent=1 // pred_check
      _
    $region35: #{tpu_custom_call.1} parent=1 // pred_check_branch
      %37 = sbr.rel (0) target = $region37
    $region36: #{tpu_custom_call.1} parent=1 // pred_region
      _
    $region37: #{tpu_custom_call.1} parent=1 // pred_fallthru
      _
    // Predicated region
    $region38: #{tpu_custom_call.1} parent=1 // pred_check
      _
    $region39: #{tpu_custom_call.1} parent=1 // pred_check_branch
      %39 = sbr.rel (0) target = $region41
    $region40: #{tpu_custom_call.1} parent=1 // pred_region
      _
    $region41: #{tpu_custom_call.1} parent=1 // pred_fallthru
      _
    // Predicated region
    $region42: #{tpu_custom_call.1} parent=1 // pred_check
      _
    $region43: #{tpu_custom_call.1} parent=1 // pred_check_branch
      %41 = sbr.rel (0) target = $region45
    $region44: #{tpu_custom_call.1} parent=1 // pred_region
      _
    $region45: #{tpu_custom_call.1} parent=1 // pred_fallthru
      _
    // Predicated region
    $region46: #{tpu_custom_call.1} parent=1 // pred_check
      _
    $region47: #{tpu_custom_call.1} parent=1 // pred_check_branch
      %43 = sbr.rel (0) target = $region49
    $region48: #{tpu_custom_call.1} parent=1 // pred_region
      _
    $region49: #{tpu_custom_call.1} parent=1 // pred_fallthru
      _
    // Predicated region
    $region50: #{tpu_custom_call.1} parent=1 // pred_check
      _
    $region51: #{tpu_custom_call.1} parent=1 // pred_check_branch
      %45 = sbr.rel (0) target = $region53
    $region52: #{tpu_custom_call.1} parent=1 // pred_region
      _
    $region53: #{tpu_custom_call.1} parent=1 // pred_fallthru
      _
    // Predicated region
    $region54: #{tpu_custom_call.1} parent=1 // pred_check
      _
    $region55: #{tpu_custom_call.1} parent=1 // pred_check_branch
      %47 = sbr.rel (0) target = $region57
    $region56: #{tpu_custom_call.1} parent=1 // pred_region
      _
    $region57: #{tpu_custom_call.1} parent=1 // pred_fallthru
      _
    %v49 = vld [vmem:[%s1] sm:$0xff]
    %v50 = vld [vmem:[%s1 + $0x8] sm:$0xff]
    %v51 = vld [vmem:[%s1 + $0x10] sm:$0xff]
    %v52 = vld [vmem:[%s1 + $0x18] sm:$0xff]
    %v53 = vld [vmem:[%s1 + $0x20] sm:$0xff]
    %v54 = vld [vmem:[%s1 + $0x28] sm:$0xff]
    %v55 = vld [vmem:[%s1 + $0x30] sm:$0xff]
    %v56 = vld [vmem:[%s1 + $0x38] sm:$0xff]
    %v57 = vld [vmem:[%s1 + $0x40] sm:$0xff]
    %v58 = vld [vmem:[%s1 + $0x48] sm:$0xff]
    %v59 = vld [vmem:[%s1 + $0x50] sm:$0xff]
    %v60 = vld [vmem:[%s1 + $0x58] sm:$0xff]
    %v61 = vld [vmem:[%s1 + $0x60] sm:$0xff]
    %v62 = vld [vmem:[%s1 + $0x68] sm:$0xff]
    %v63 = vld [vmem:[%s1 + $0x70] sm:$0xff]
    %v64 = vld [vmem:[%s1 + $0x78] sm:$0xff]
    %v65 = vld [vmem:[%s2] sm:$0xff]
    %v66 = vld [vmem:[%s3] sm:$0xff]
    %v67 = vld [vmem:[%s3 + $0x8] sm:$0xff]
    %v68 = vld [vmem:[%s3 + $0x10] sm:$0xff]
    %v69 = vld [vmem:[%s3 + $0x18] sm:$0xff]
    %v70 = vld [vmem:[%s0] sm:$0xf]
    %v71 = vld [vmem:[%s0 + $0x4] sm:$0xf]
    %v72 = vld [vmem:[%s0 + $0x8] sm:$0xf]
    %v73 = vld [vmem:[%s0 + $0xc] sm:$0xf]
    %v74 = vld [vmem:[%s4] sm:$0xf]
    %v75 = vld [vmem:[%s4 + $0x4] sm:$0xf]
    %v76 = vld [vmem:[%s4 + $0x8] sm:$0xf]
    %v77 = vld [vmem:[%s4 + $0xc] sm:$0xf]
    %v78 = vld [vmem:[%s5] sm:$0xff]
    %v79 = vld [vmem:[%s5 + $0x8] sm:$0xff]
    %v80 = vld [vmem:[%s5 + $0x10] sm:$0xff]
    %v81 = vld [vmem:[%s5 + $0x18] sm:$0xff]
    %83 = vset.pattern.permute.xlu0 0
    %84 = vperm.xlu0 %83, %v78
    %v85 = vpop.permute.xlu0 %84
    %88 = vset.pattern.permute.xlu0 0
    %89 = vperm.xlu0 %88, %v79
    %v90 = vpop.permute.xlu0 %89
    %93 = vset.pattern.permute.xlu0 0
    %94 = vperm.xlu0 %93, %v80
    %v95 = vpop.permute.xlu0 %94
    %98 = vset.pattern.permute.xlu0 0
    %99 = vperm.xlu0 %98, %v81
    %v100 = vpop.permute.xlu0 %99
    %v106 = vunpack.c.l.b16 %v74
    %v107 = vunpack.c.l.b16 %v75
    %v108 = vunpack.c.l.b16 %v76
    %v109 = vunpack.c.l.b16 %v77
    %v110 = vpack.c.b16 %v107, %v106
    %v111 = vpack.c.b16 %v109, %v108
    %v116 = vunpack.c.l.b16 %v70
    %v117 = vunpack.c.l.b16 %v71
    %v118 = vunpack.c.l.b16 %v72
    %v119 = vunpack.c.l.b16 %v73
    %v120 = vpack.c.b16 %v117, %v116
    %v121 = vpack.c.b16 %v119, %v118
    %vm124 = vcmask 261120
    %v126 = vsel %vm124, %v110, 0
    %v129 = vsel %vm124, %v111, 0
    %131 = vmatprep.subr.bf16.mxu0 0
    %132 = vmatpush1.bf16.msra.mxu0 %v120
    %133 = vmatprep.subr.bf16.mxu0 0
    %134 = vmatpush1.bf16.msra.mxu0 %v121
    %135 = vmatprep.subr.bf16.mxu0 0
    %136 = vmatpush1.bf16.msra.mxu0 0
    %137 = vmatprep.subr.bf16.mxu0 0
    %138 = vmatpush1.bf16.msra.mxu0 0
    %139 = vmatprep.subr.bf16.mxu0 0
    %140 = vmatpush1.bf16.msra.mxu0 0
    %141 = vmatprep.subr.bf16.mxu0 0
    %142 = vmatpush1.bf16.msra.mxu0 0
    %143 = vmatprep.subr.bf16.mxu0 0
    %144 = vmatpush1.bf16.msra.mxu0 0
    %145 = vmatprep.subr.bf16.mxu0 0
    %146 = vmatpush1.bf16.msra.mxu0 0
    %147 = vmatprep.subr.bf16.mxu0 0
    %148 = vmatpush1.bf16.msra.mxu0 0
    %149 = vmatprep.subr.bf16.mxu0 0
    %150 = vmatpush1.bf16.msra.mxu0 0
    %151 = vmatprep.subr.bf16.mxu0 0
    %152 = vmatpush1.bf16.msra.mxu0 0
    %153 = vmatprep.subr.bf16.mxu0 0
    %154 = vmatpush1.bf16.msra.mxu0 0
    %155 = vmatprep.subr.bf16.mxu0 0
    %156 = vmatpush1.bf16.msra.mxu0 0
    %157 = vmatprep.subr.bf16.mxu0 0
    %158 = vmatpush1.bf16.msra.mxu0 0
    %159 = vmatprep.subr.bf16.mxu0 0
    %160 = vmatpush1.bf16.msra.mxu0 0
    %161 = vmatprep.subr.bf16.mxu0 0
    %162 = vmatpush1.bf16.msra.mxu0 0
    %163 = vmatprep.mubr.bf16.mxu0 0
    %164 = vmatmul.mubr.bf16.gmra.mrb[0].mxu0 %v126
    %v165 = vpop.f32.mrb[0].mxu0
    %v166 = vadd.f32 %v85, %v165
    %v167 = vpop.f32.mrb[0].mxu0
    %v168 = vpop.f32.mrb[0].mxu0
    %v169 = vadd.f32 %v90, %v168
    %v170 = vpop.f32.mrb[0].mxu0
    %171 = vmatprep.mubr.bf16.mxu0 0
    %172 = vmatmul.mubr.bf16.gmra.mrb[0].mxu0 %v129
    %v173 = vpop.f32.mrb[0].mxu0
    %v174 = vadd.f32 %v95, %v173
    %v175 = vpop.f32.mrb[0].mxu0
    %v176 = vpop.f32.mrb[0].mxu0
    %v177 = vadd.f32 %v100, %v176
    %v178 = vpop.f32.mrb[0].mxu0
    %179 = vdwg.mxu0
    %v180 = vld [vmem:[%s6] sm:$0xff]
    %v181 = vld [vmem:[%s6 + $0x8] sm:$0xff]
    %v182 = vld [vmem:[%s6 + $0x10] sm:$0xff]
    %v183 = vld [vmem:[%s6 + $0x18] sm:$0xff]
    %v184 = vld [vmem:[%s7] sm:$0xff]
    %v185 = vld [vmem:[%s7 + $0x8] sm:$0xff]
    %v186 = vld [vmem:[%s7 + $0x10] sm:$0xff]
    %v187 = vld [vmem:[%s7 + $0x18] sm:$0xff]
    %188 = vmatprep.subr.mxu0 0.0
    %189 = vmatpush1.msra.mxu0 %v49
    %190 = vmatprep.subr.mxu0 0.0
    %191 = vmatpush1.msra.mxu0 %v50
    %192 = vmatprep.subr.mxu0 0.0
    %193 = vmatpush1.msra.mxu0 %v51
    %194 = vmatprep.subr.mxu0 0.0
    %195 = vmatpush1.msra.mxu0 %v52
    %196 = vmatprep.subr.mxu0 0.0
    %197 = vmatpush1.msra.mxu0 %v53
    %198 = vmatprep.subr.mxu0 0.0
    %199 = vmatpush1.msra.mxu0 %v54
    %200 = vmatprep.subr.mxu0 0.0
    %201 = vmatpush1.msra.mxu0 %v55
    %202 = vmatprep.subr.mxu0 0.0
    %203 = vmatpush1.msra.mxu0 %v56
    %204 = vmatprep.subr.mxu0 0.0
    %205 = vmatpush1.msra.mxu0 %v57
    %206 = vmatprep.subr.mxu0 0.0
    %207 = vmatpush1.msra.mxu0 %v58
    %208 = vmatprep.subr.mxu0 0.0
    %209 = vmatpush1.msra.mxu0 %v59
    %210 = vmatprep.subr.mxu0 0.0
    %211 = vmatpush1.msra.mxu0 %v60
    %212 = vmatprep.subr.mxu0 0.0
    %213 = vmatpush1.msra.mxu0 %v61
    %214 = vmatprep.subr.mxu0 0.0
    %215 = vmatpush1.msra.mxu0 %v62
    %216 = vmatprep.subr.mxu0 0.0
    %217 = vmatpush1.msra.mxu0 %v63
    %218 = vmatprep.subr.mxu0 0.0
    %219 = vmatpush1.msra.mxu0 %v64
    %220 = vmatprep.subr.mxu0 0.0
    %221 = vmatpush1.msra.mxu0 0.0
    %222 = vmatprep.subr.mxu0 0.0
    %223 = vmatpush1.msra.mxu0 0.0
    %224 = vmatprep.subr.mxu0 0.0
    %225 = vmatpush1.msra.mxu0 0.0
    %226 = vmatprep.subr.mxu0 0.0
    %227 = vmatpush1.msra.mxu0 0.0
    %228 = vmatprep.subr.mxu0 0.0
    %229 = vmatpush1.msra.mxu0 0.0
    %230 = vmatprep.subr.mxu0 0.0
    %231 = vmatpush1.msra.mxu0 0.0
    %232 = vmatprep.subr.mxu0 0.0
    %233 = vmatpush1.msra.mxu0 0.0
    %234 = vmatprep.subr.mxu0 0.0
    %235 = vmatpush1.msra.mxu0 0.0
    %236 = vmatprep.subr.mxu0 0.0
    %237 = vmatpush1.msra.mxu0 0.0
    %238 = vmatprep.subr.mxu0 0.0
    %239 = vmatpush1.msra.mxu0 0.0
    %240 = vmatprep.subr.mxu0 0.0
    %241 = vmatpush1.msra.mxu0 0.0
    %242 = vmatprep.subr.mxu0 0.0
    %243 = vmatpush1.msra.mxu0 0.0
    %244 = vmatprep.subr.mxu0 0.0
    %245 = vmatpush1.msra.mxu0 0.0
    %246 = vmatprep.subr.mxu0 0.0
    %247 = vmatpush1.msra.mxu0 0.0
    %248 = vmatprep.subr.mxu0 0.0
    %249 = vmatpush1.msra.mxu0 0.0
    %250 = vmatprep.subr.mxu0 0.0
    %251 = vmatpush1.msra.mxu0 0.0
    %252 = vmatprep.mubr.f32.mxu0 0.0
    %253 = vmatmul.mubr.f32.gmra.mrb[0].mxu0 %v166
    %v254 = vpop.f32.mrb[0].mxu0
    %v255 = vadd.f32 0.0, %v254
    %v256 = vpop.f32.mrb[0].mxu0
    %257 = vmatprep.mubr.f32.mxu0 0.0
    %258 = vmatmul.mubr.f32.gmra.mrb[0].mxu0 %v169
    %v259 = vpop.f32.mrb[0].mxu0
    %v260 = vadd.f32 0.0, %v259
    %v261 = vpop.f32.mrb[0].mxu0
    %262 = vmatprep.mubr.f32.mxu0 0.0
    %263 = vmatmul.mubr.f32.gmra.mrb[0].mxu0 %v174
    %v264 = vpop.f32.mrb[0].mxu0
    %v265 = vadd.f32 0.0, %v264
    %v266 = vpop.f32.mrb[0].mxu0
    %267 = vmatprep.mubr.f32.mxu0 0.0
    %268 = vmatmul.mubr.f32.gmra.mrb[0].mxu0 %v177
    %v269 = vpop.f32.mrb[0].mxu0
    %v270 = vadd.f32 0.0, %v269
    %v271 = vpop.f32.mrb[0].mxu0
    %272 = vdwg.mxu0
    %v273 = vmul.f32 %v166, %v166
    %v274 = vmul.f32 %v169, %v169
    %v275 = vmul.f32 %v174, %v174
    %v276 = vmul.f32 %v177, %v177
    %277 = vmatprep.subr.mxu0 0.0
    %278 = vmatpush1.msra.mxu0 %v49
    %279 = vmatprep.subr.mxu0 0.0
    %280 = vmatpush1.msra.mxu0 %v50
    %281 = vmatprep.subr.mxu0 0.0
    %282 = vmatpush1.msra.mxu0 %v51
    %283 = vmatprep.subr.mxu0 0.0
    %284 = vmatpush1.msra.mxu0 %v52
    %285 = vmatprep.subr.mxu0 0.0
    %286 = vmatpush1.msra.mxu0 %v53
    %287 = vmatprep.subr.mxu0 0.0
    %288 = vmatpush1.msra.mxu0 %v54
    %289 = vmatprep.subr.mxu0 0.0
    %290 = vmatpush1.msra.mxu0 %v55
    %291 = vmatprep.subr.mxu0 0.0
    %292 = vmatpush1.msra.mxu0 %v56
    %293 = vmatprep.subr.mxu0 0.0
    %294 = vmatpush1.msra.mxu0 %v57
    %295 = vmatprep.subr.mxu0 0.0
    %296 = vmatpush1.msra.mxu0 %v58
    %297 = vmatprep.subr.mxu0 0.0
    %298 = vmatpush1.msra.mxu0 %v59
    %299 = vmatprep.subr.mxu0 0.0
    %300 = vmatpush1.msra.mxu0 %v60
    %301 = vmatprep.subr.mxu0 0.0
    %302 = vmatpush1.msra.mxu0 %v61
    %303 = vmatprep.subr.mxu0 0.0
    %304 = vmatpush1.msra.mxu0 %v62
    %305 = vmatprep.subr.mxu0 0.0
    %306 = vmatpush1.msra.mxu0 %v63
    %307 = vmatprep.subr.mxu0 0.0
    %308 = vmatpush1.msra.mxu0 %v64
    %309 = vmatprep.subr.mxu0 0.0
    %310 = vmatpush1.msra.mxu0 0.0
    %311 = vmatprep.subr.mxu0 0.0
    %312 = vmatpush1.msra.mxu0 0.0
    %313 = vmatprep.subr.mxu0 0.0
    %314 = vmatpush1.msra.mxu0 0.0
    %315 = vmatprep.subr.mxu0 0.0
    %316 = vmatpush1.msra.mxu0 0.0
    %317 = vmatprep.subr.mxu0 0.0
    %318 = vmatpush1.msra.mxu0 0.0
    %319 = vmatprep.subr.mxu0 0.0
    %320 = vmatpush1.msra.mxu0 0.0
    %321 = vmatprep.subr.mxu0 0.0
    %322 = vmatpush1.msra.mxu0 0.0
    %323 = vmatprep.subr.mxu0 0.0
    %324 = vmatpush1.msra.mxu0 0.0
    %325 = vmatprep.subr.mxu0 0.0
    %326 = vmatpush1.msra.mxu0 0.0
    %327 = vmatprep.subr.mxu0 0.0
    %328 = vmatpush1.msra.mxu0 0.0
    %329 = vmatprep.subr.mxu0 0.0
    %330 = vmatpush1.msra.mxu0 0.0
    %331 = vmatprep.subr.mxu0 0.0
    %332 = vmatpush1.msra.mxu0 0.0
    %333 = vmatprep.subr.mxu0 0.0
    %334 = vmatpush1.msra.mxu0 0.0
    %335 = vmatprep.subr.mxu0 0.0
    %336 = vmatpush1.msra.mxu0 0.0
    %337 = vmatprep.subr.mxu0 0.0
    %338 = vmatpush1.msra.mxu0 0.0
    %339 = vmatprep.subr.mxu0 0.0
    %340 = vmatpush1.msra.mxu0 0.0
    %341 = vmatprep.mubr.f32.mxu0 0.0
    %342 = vmatmul.mubr.f32.gmra.mrb[0].mxu0 %v273
    %v343 = vpop.f32.mrb[0].mxu0
    %v344 = vadd.f32 0.0, %v343
    %v345 = vpop.f32.mrb[0].mxu0
    %346 = vmatprep.mubr.f32.mxu0 0.0
    %347 = vmatmul.mubr.f32.gmra.mrb[0].mxu0 %v274
    %v348 = vpop.f32.mrb[0].mxu0
    %v349 = vadd.f32 0.0, %v348
    %v350 = vpop.f32.mrb[0].mxu0
    %351 = vmatprep.mubr.f32.mxu0 0.0
    %352 = vmatmul.mubr.f32.gmra.mrb[0].mxu0 %v275
    %v353 = vpop.f32.mrb[0].mxu0
    %v354 = vadd.f32 0.0, %v353
    %v355 = vpop.f32.mrb[0].mxu0
    %356 = vmatprep.mubr.f32.mxu0 0.0
    %357 = vmatmul.mubr.f32.gmra.mrb[0].mxu0 %v276
    %v358 = vpop.f32.mrb[0].mxu0
    %v359 = vadd.f32 0.0, %v358
    %v360 = vpop.f32.mrb[0].mxu0
    %361 = vdwg.mxu0
    %v363 = vsel %vm124, %v66, 0
    %v366 = vsel %vm124, %v67, 0
    %v369 = vsel %vm124, %v68, 0
    %v372 = vsel %vm124, %v69, 0
    %374 = vmatprep.subr.mxu0 0.0
    %375 = vmatpush1.msra.mxu0 %v255
    %376 = vmatprep.subr.mxu0 0.0
    %377 = vmatpush1.msra.mxu0 %v260
    %378 = vmatprep.subr.mxu0 0.0
    %379 = vmatpush1.msra.mxu0 %v265
    %380 = vmatprep.subr.mxu0 0.0
    %381 = vmatpush1.msra.mxu0 %v270
    %382 = vmatprep.subr.mxu0 0.0
    %383 = vmatpush1.msra.mxu0 0.0
    %384 = vmatprep.subr.mxu0 0.0
    %385 = vmatpush1.msra.mxu0 0.0
    %386 = vmatprep.subr.mxu0 0.0
    %387 = vmatpush1.msra.mxu0 0.0
    %388 = vmatprep.subr.mxu0 0.0
    %389 = vmatpush1.msra.mxu0 0.0
    %390 = vmatprep.subr.mxu0 0.0
    %391 = vmatpush1.msra.mxu0 0.0
    %392 = vmatprep.subr.mxu0 0.0
    %393 = vmatpush1.msra.mxu0 0.0
    %394 = vmatprep.subr.mxu0 0.0
    %395 = vmatpush1.msra.mxu0 0.0
    %396 = vmatprep.subr.mxu0 0.0
    %397 = vmatpush1.msra.mxu0 0.0
    %398 = vmatprep.subr.mxu0 0.0
    %399 = vmatpush1.msra.mxu0 0.0
    %400 = vmatprep.subr.mxu0 0.0
    %401 = vmatpush1.msra.mxu0 0.0
    %402 = vmatprep.subr.mxu0 0.0
    %403 = vmatpush1.msra.mxu0 0.0
    %404 = vmatprep.subr.mxu0 0.0
    %405 = vmatpush1.msra.mxu0 0.0
    %406 = vmatprep.subr.mxu0 0.0
    %407 = vmatpush1.msra.mxu0 0.0
    %408 = vmatprep.subr.mxu0 0.0
    %409 = vmatpush1.msra.mxu0 0.0
    %410 = vmatprep.subr.mxu0 0.0
    %411 = vmatpush1.msra.mxu0 0.0
    %412 = vmatprep.subr.mxu0 0.0
    %413 = vmatpush1.msra.mxu0 0.0
    %414 = vmatprep.subr.mxu0 0.0
    %415 = vmatpush1.msra.mxu0 0.0
    %416 = vmatprep.subr.mxu0 0.0
    %417 = vmatpush1.msra.mxu0 0.0
    %418 = vmatprep.subr.mxu0 0.0
    %419 = vmatpush1.msra.mxu0 0.0
    %420 = vmatprep.subr.mxu0 0.0
    %421 = vmatpush1.msra.mxu0 0.0
    %422 = vmatprep.subr.mxu0 0.0
    %423 = vmatpush1.msra.mxu0 0.0
    %424 = vmatprep.subr.mxu0 0.0
    %425 = vmatpush1.msra.mxu0 0.0
    %426 = vmatprep.subr.mxu0 0.0
    %427 = vmatpush1.msra.mxu0 0.0
    %428 = vmatprep.subr.mxu0 0.0
    %429 = vmatpush1.msra.mxu0 0.0
    %430 = vmatprep.subr.mxu0 0.0
    %431 = vmatpush1.msra.mxu0 0.0
    %432 = vmatprep.subr.mxu0 0.0
    %433 = vmatpush1.msra.mxu0 0.0
    %434 = vmatprep.subr.mxu0 0.0
    %435 = vmatpush1.msra.mxu0 0.0
    %436 = vmatprep.subr.mxu0 0.0
    %437 = vmatpush1.msra.mxu0 0.0
    %438 = vmatprep.mubr.f32.mxu0 0.0
    %439 = vmatmul.mubr.f32.gmra.mrb[0].mxu0 %v363
    %v440 = vpop.f32.mrb[0].mxu0
    %v441 = vadd.f32 0.0, %v440
    %v442 = vpop.f32.mrb[0].mxu0
    %443 = vmatprep.mubr.f32.mxu0 0.0
    %444 = vmatmul.mubr.f32.gmra.mrb[0].mxu0 %v366
    %v445 = vpop.f32.mrb[0].mxu0
    %v446 = vadd.f32 0.0, %v445
    %v447 = vpop.f32.mrb[0].mxu0
    %448 = vmatprep.mubr.f32.mxu0 0.0
    %449 = vmatmul.mubr.f32.gmra.mrb[0].mxu0 %v369
    %v450 = vpop.f32.mrb[0].mxu0
    %v451 = vadd.f32 0.0, %v450
    %v452 = vpop.f32.mrb[0].mxu0
    %453 = vmatprep.mubr.f32.mxu0 0.0
    %454 = vmatmul.mubr.f32.gmra.mrb[0].mxu0 %v372
    %v455 = vpop.f32.mrb[0].mxu0
    %v456 = vadd.f32 0.0, %v455
    %v457 = vpop.f32.mrb[0].mxu0
    %458 = vdwg.mxu0
    %v459 = vmul.f32 %v441, 0.03125
    %v460 = vmul.f32 %v446, 0.03125
    %v461 = vmul.f32 %v451, 0.03125
    %v462 = vmul.f32 %v456, 0.03125
    %463 = vmatprep.subr.mxu0 0.0
    %464 = vmatpush1.msra.mxu0 %v344
    %465 = vmatprep.subr.mxu0 0.0
    %466 = vmatpush1.msra.mxu0 %v349
    %467 = vmatprep.subr.mxu0 0.0
    %468 = vmatpush1.msra.mxu0 %v354
    %469 = vmatprep.subr.mxu0 0.0
    %470 = vmatpush1.msra.mxu0 %v359
    %471 = vmatprep.subr.mxu0 0.0
    %472 = vmatpush1.msra.mxu0 0.0
    %473 = vmatprep.subr.mxu0 0.0
    %474 = vmatpush1.msra.mxu0 0.0
    %475 = vmatprep.subr.mxu0 0.0
    %476 = vmatpush1.msra.mxu0 0.0
    %477 = vmatprep.subr.mxu0 0.0
    %478 = vmatpush1.msra.mxu0 0.0
    %479 = vmatprep.subr.mxu0 0.0
    %480 = vmatpush1.msra.mxu0 0.0
    %481 = vmatprep.subr.mxu0 0.0
    %482 = vmatpush1.msra.mxu0 0.0
    %483 = vmatprep.subr.mxu0 0.0
    %484 = vmatpush1.msra.mxu0 0.0
    %485 = vmatprep.subr.mxu0 0.0
    %486 = vmatpush1.msra.mxu0 0.0
    %487 = vmatprep.subr.mxu0 0.0
    %488 = vmatpush1.msra.mxu0 0.0
    %489 = vmatprep.subr.mxu0 0.0
    %490 = vmatpush1.msra.mxu0 0.0
    %491 = vmatprep.subr.mxu0 0.0
    %492 = vmatpush1.msra.mxu0 0.0
    %493 = vmatprep.subr.mxu0 0.0
    %494 = vmatpush1.msra.mxu0 0.0
    %495 = vmatprep.subr.mxu0 0.0
    %496 = vmatpush1.msra.mxu0 0.0
    %497 = vmatprep.subr.mxu0 0.0
    %498 = vmatpush1.msra.mxu0 0.0
    %499 = vmatprep.subr.mxu0 0.0
    %500 = vmatpush1.msra.mxu0 0.0
    %501 = vmatprep.subr.mxu0 0.0
    %502 = vmatpush1.msra.mxu0 0.0
    %503 = vmatprep.subr.mxu0 0.0
    %504 = vmatpush1.msra.mxu0 0.0
    %505 = vmatprep.subr.mxu0 0.0
    %506 = vmatpush1.msra.mxu0 0.0
    %507 = vmatprep.subr.mxu0 0.0
    %508 = vmatpush1.msra.mxu0 0.0
    %509 = vmatprep.subr.mxu0 0.0
    %510 = vmatpush1.msra.mxu0 0.0
    %511 = vmatprep.subr.mxu0 0.0
    %512 = vmatpush1.msra.mxu0 0.0
    %513 = vmatprep.subr.mxu0 0.0
    %514 = vmatpush1.msra.mxu0 0.0
    %515 = vmatprep.subr.mxu0 0.0
    %516 = vmatpush1.msra.mxu0 0.0
    %517 = vmatprep.subr.mxu0 0.0
    %518 = vmatpush1.msra.mxu0 0.0
    %519 = vmatprep.subr.mxu0 0.0
    %520 = vmatpush1.msra.mxu0 0.0
    %521 = vmatprep.subr.mxu0 0.0
    %522 = vmatpush1.msra.mxu0 0.0
    %523 = vmatprep.subr.mxu0 0.0
    %524 = vmatpush1.msra.mxu0 0.0
    %525 = vmatprep.subr.mxu0 0.0
    %526 = vmatpush1.msra.mxu0 0.0
    %527 = vmatprep.mubr.f32.mxu0 0.0
    %528 = vmatmul.mubr.f32.gmra.mrb[0].mxu0 %v363
    %v529 = vpop.f32.mrb[0].mxu0
    %v530 = vadd.f32 0.0, %v529
    %v531 = vpop.f32.mrb[0].mxu0
    %532 = vmatprep.mubr.f32.mxu0 0.0
    %533 = vmatmul.mubr.f32.gmra.mrb[0].mxu0 %v366
    %v534 = vpop.f32.mrb[0].mxu0
    %v535 = vadd.f32 0.0, %v534
    %v536 = vpop.f32.mrb[0].mxu0
    %537 = vmatprep.mubr.f32.mxu0 0.0
    %538 = vmatmul.mubr.f32.gmra.mrb[0].mxu0 %v369
    %v539 = vpop.f32.mrb[0].mxu0
    %v540 = vadd.f32 0.0, %v539
    %v541 = vpop.f32.mrb[0].mxu0
    %542 = vmatprep.mubr.f32.mxu0 0.0
    %543 = vmatmul.mubr.f32.gmra.mrb[0].mxu0 %v372
    %v544 = vpop.f32.mrb[0].mxu0
    %v545 = vadd.f32 0.0, %v544
    %v546 = vpop.f32.mrb[0].mxu0
    %547 = vdwg.mxu0
    %v548 = vmul.f32 %v530, 0.03125
    %v549 = vmul.f32 %v535, 0.03125
    %v550 = vmul.f32 %v540, 0.03125
    %v551 = vmul.f32 %v545, 0.03125
    %v552 = vmul.f32 %v459, %v459
    %v553 = vmul.f32 %v460, %v460
    %v554 = vmul.f32 %v461, %v461
    %v555 = vmul.f32 %v462, %v462
    %v556 = vsub.f32 %v548, %v552
    %v557 = vsub.f32 %v549, %v553
    %v558 = vsub.f32 %v550, %v554
    %v559 = vsub.f32 %v551, %v555
    %v560 = vmax.f32 %v556, 0.0
    %v561 = vmax.f32 %v557, 0.0
    %v562 = vmax.f32 %v558, 0.0
    %v563 = vmax.f32 %v559, 0.0
    %v564 = vadd.f32 %v560, 1e-05
    %v565 = vadd.f32 %v561, 1e-05
    %v566 = vadd.f32 %v562, 1e-05
    %v567 = vadd.f32 %v563, 1e-05
    %v568 = vrsqrt.pop %v564
    %v569 = vrsqrt.pop %v565
    %v570 = vrsqrt.pop %v566
    %v571 = vrsqrt.pop %v567
    %573 = vset.pattern.permute.xlu0 0
    %574 = vperm.xlu0 %573, %v180
    %v575 = vpop.permute.xlu0 %574
    %578 = vset.pattern.permute.xlu0 0
    %579 = vperm.xlu0 %578, %v181
    %v580 = vpop.permute.xlu0 %579
    %583 = vset.pattern.permute.xlu0 0
    %584 = vperm.xlu0 %583, %v182
    %v585 = vpop.permute.xlu0 %584
    %588 = vset.pattern.permute.xlu0 0
    %589 = vperm.xlu0 %588, %v183
    %v590 = vpop.permute.xlu0 %589
    %v592 = vmul.f32 %v568, %v575
    %v593 = vmul.f32 %v569, %v580
    %v594 = vmul.f32 %v570, %v585
    %v595 = vmul.f32 %v571, %v590
    %v596 = vmul.f32 %v459, %v592
    %v597 = vmul.f32 %v460, %v593
    %v598 = vmul.f32 %v461, %v594
    %v599 = vmul.f32 %v462, %v595
    %601 = vset.pattern.permute.xlu0 0
    %602 = vperm.xlu0 %601, %v184
    %v603 = vpop.permute.xlu0 %602
    %606 = vset.pattern.permute.xlu0 0
    %607 = vperm.xlu0 %606, %v185
    %v608 = vpop.permute.xlu0 %607
    %611 = vset.pattern.permute.xlu0 0
    %612 = vperm.xlu0 %611, %v186
    %v613 = vpop.permute.xlu0 %612
    %616 = vset.pattern.permute.xlu0 0
    %617 = vperm.xlu0 %616, %v187
    %v618 = vpop.permute.xlu0 %617
    %v620 = vsub.f32 %v603, %v596
    %v621 = vsub.f32 %v608, %v597
    %v622 = vsub.f32 %v613, %v598
    %v623 = vsub.f32 %v618, %v599
    %vm624 = vcmask 64512
    %v626 = vsel %vm624, %v592, 0
    %v629 = vsel %vm624, %v593, 0
    %v632 = vsel %vm624, %v594, 0
    %v635 = vsel %vm624, %v595, 0
    %637 = vmatprep.subr.mxu0 0.0
    %638 = vmatpush1.msra.mxu0 %v65
    %639 = vmatprep.subr.mxu0 0.0
    %640 = vmatpush1.msra.mxu0 0.0
    %641 = vmatprep.subr.mxu0 0.0
    %642 = vmatpush1.msra.mxu0 0.0
    %643 = vmatprep.subr.mxu0 0.0
    %644 = vmatpush1.msra.mxu0 0.0
    %645 = vmatprep.subr.mxu0 0.0
    %646 = vmatpush1.msra.mxu0 0.0
    %647 = vmatprep.subr.mxu0 0.0
    %648 = vmatpush1.msra.mxu0 0.0
    %649 = vmatprep.subr.mxu0 0.0
    %650 = vmatpush1.msra.mxu0 0.0
    %651 = vmatprep.subr.mxu0 0.0
    %652 = vmatpush1.msra.mxu0 0.0
    %653 = vmatprep.subr.mxu0 0.0
    %654 = vmatpush1.msra.mxu0 0.0
    %655 = vmatprep.subr.mxu0 0.0
    %656 = vmatpush1.msra.mxu0 0.0
    %657 = vmatprep.subr.mxu0 0.0
    %658 = vmatpush1.msra.mxu0 0.0
    %659 = vmatprep.subr.mxu0 0.0
    %660 = vmatpush1.msra.mxu0 0.0
    %661 = vmatprep.subr.mxu0 0.0
    %662 = vmatpush1.msra.mxu0 0.0
    %663 = vmatprep.subr.mxu0 0.0
    %664 = vmatpush1.msra.mxu0 0.0
    %665 = vmatprep.subr.mxu0 0.0
    %666 = vmatpush1.msra.mxu0 0.0
    %667 = vmatprep.subr.mxu0 0.0
    %668 = vmatpush1.msra.mxu0 0.0
    %669 = vmatprep.subr.mxu0 0.0
    %670 = vmatpush1.msra.mxu0 0.0
    %671 = vmatprep.subr.mxu0 0.0
    %672 = vmatpush1.msra.mxu0 0.0
    %673 = vmatprep.subr.mxu0 0.0
    %674 = vmatpush1.msra.mxu0 0.0
    %675 = vmatprep.subr.mxu0 0.0
    %676 = vmatpush1.msra.mxu0 0.0
    %677 = vmatprep.subr.mxu0 0.0
    %678 = vmatpush1.msra.mxu0 0.0
    %679 = vmatprep.subr.mxu0 0.0
    %680 = vmatpush1.msra.mxu0 0.0
    %681 = vmatprep.subr.mxu0 0.0
    %682 = vmatpush1.msra.mxu0 0.0
    %683 = vmatprep.subr.mxu0 0.0
    %684 = vmatpush1.msra.mxu0 0.0
    %685 = vmatprep.subr.mxu0 0.0
    %686 = vmatpush1.msra.mxu0 0.0
    %687 = vmatprep.subr.mxu0 0.0
    %688 = vmatpush1.msra.mxu0 0.0
    %689 = vmatprep.subr.mxu0 0.0
    %690 = vmatpush1.msra.mxu0 0.0
    %691 = vmatprep.subr.mxu0 0.0
    %692 = vmatpush1.msra.mxu0 0.0
    %693 = vmatprep.subr.mxu0 0.0
    %694 = vmatpush1.msra.mxu0 0.0
    %695 = vmatprep.subr.mxu0 0.0
    %696 = vmatpush1.msra.mxu0 0.0
    %697 = vmatprep.subr.mxu0 0.0
    %698 = vmatpush1.msra.mxu0 0.0
    %699 = vmatprep.subr.mxu0 0.0
    %700 = vmatpush1.msra.mxu0 0.0
    %701 = vmatprep.mubr.f32.mxu0 0.0
    %702 = vmatmul.mubr.f32.gmra.mrb[0].mxu0 %v626
    %v703 = vpop.f32.mrb[0].mxu0
    %v704 = vadd.f32 0.0, %v703
    %v705 = vpop.f32.mrb[0].mxu0
    %706 = vmatprep.mubr.f32.mxu0 0.0
    %707 = vmatmul.mubr.f32.gmra.mrb[0].mxu0 %v629
    %v708 = vpop.f32.mrb[0].mxu0
    %v709 = vadd.f32 0.0, %v708
    %v710 = vpop.f32.mrb[0].mxu0
    %711 = vmatprep.mubr.f32.mxu0 0.0
    %712 = vmatmul.mubr.f32.gmra.mrb[0].mxu0 %v632
    %v713 = vpop.f32.mrb[0].mxu0
    %v714 = vadd.f32 0.0, %v713
    %v715 = vpop.f32.mrb[0].mxu0
    %716 = vmatprep.mubr.f32.mxu0 0.0
    %717 = vmatmul.mubr.f32.gmra.mrb[0].mxu0 %v635
    %v718 = vpop.f32.mrb[0].mxu0
    %v719 = vadd.f32 0.0, %v718
    %v720 = vpop.f32.mrb[0].mxu0
    %721 = vdwg.mxu0
    %v722 = vmul.f32 %v166, %v704
    %v723 = vmul.f32 %v169, %v709
    %v724 = vmul.f32 %v174, %v714
    %v725 = vmul.f32 %v177, %v719
    %v727 = vsel %vm624, %v620, 0
    %v730 = vsel %vm624, %v621, 0
    %v733 = vsel %vm624, %v622, 0
    %v736 = vsel %vm624, %v623, 0
    %738 = vmatprep.subr.mxu0 0.0
    %739 = vmatpush1.msra.mxu0 %v65
    %740 = vmatprep.subr.mxu0 0.0
    %741 = vmatpush1.msra.mxu0 0.0
    %742 = vmatprep.subr.mxu0 0.0
    %743 = vmatpush1.msra.mxu0 0.0
    %744 = vmatprep.subr.mxu0 0.0
    %745 = vmatpush1.msra.mxu0 0.0
    %746 = vmatprep.subr.mxu0 0.0
    %747 = vmatpush1.msra.mxu0 0.0
    %748 = vmatprep.subr.mxu0 0.0
    %749 = vmatpush1.msra.mxu0 0.0
    %750 = vmatprep.subr.mxu0 0.0
    %751 = vmatpush1.msra.mxu0 0.0
    %752 = vmatprep.subr.mxu0 0.0
    %753 = vmatpush1.msra.mxu0 0.0
    %754 = vmatprep.subr.mxu0 0.0
    %755 = vmatpush1.msra.mxu0 0.0
    %756 = vmatprep.subr.mxu0 0.0
    %757 = vmatpush1.msra.mxu0 0.0
    %758 = vmatprep.subr.mxu0 0.0
    %759 = vmatpush1.msra.mxu0 0.0
    %760 = vmatprep.subr.mxu0 0.0
    %761 = vmatpush1.msra.mxu0 0.0
    %762 = vmatprep.subr.mxu0 0.0
    %763 = vmatpush1.msra.mxu0 0.0
    %764 = vmatprep.subr.mxu0 0.0
    %765 = vmatpush1.msra.mxu0 0.0
    %766 = vmatprep.subr.mxu0 0.0
    %767 = vmatpush1.msra.mxu0 0.0
    %768 = vmatprep.subr.mxu0 0.0
    %769 = vmatpush1.msra.mxu0 0.0
    %770 = vmatprep.subr.mxu0 0.0
    %771 = vmatpush1.msra.mxu0 0.0
    %772 = vmatprep.subr.mxu0 0.0
    %773 = vmatpush1.msra.mxu0 0.0
    %774 = vmatprep.subr.mxu0 0.0
    %775 = vmatpush1.msra.mxu0 0.0
    %776 = vmatprep.subr.mxu0 0.0
    %777 = vmatpush1.msra.mxu0 0.0
    %778 = vmatprep.subr.mxu0 0.0
    %779 = vmatpush1.msra.mxu0 0.0
    %780 = vmatprep.subr.mxu0 0.0
    %781 = vmatpush1.msra.mxu0 0.0
    %782 = vmatprep.subr.mxu0 0.0
    %783 = vmatpush1.msra.mxu0 0.0
    %784 = vmatprep.subr.mxu0 0.0
    %785 = vmatpush1.msra.mxu0 0.0
    %786 = vmatprep.subr.mxu0 0.0
    %787 = vmatpush1.msra.mxu0 0.0
    %788 = vmatprep.subr.mxu0 0.0
    %789 = vmatpush1.msra.mxu0 0.0
    %790 = vmatprep.subr.mxu0 0.0
    %791 = vmatpush1.msra.mxu0 0.0
    %792 = vmatprep.subr.mxu0 0.0
    %793 = vmatpush1.msra.mxu0 0.0
    %794 = vmatprep.subr.mxu0 0.0
    %795 = vmatpush1.msra.mxu0 0.0
    %796 = vmatprep.subr.mxu0 0.0
    %797 = vmatpush1.msra.mxu0 0.0
    %798 = vmatprep.subr.mxu0 0.0
    %799 = vmatpush1.msra.mxu0 0.0
    %800 = vmatprep.subr.mxu0 0.0
    %801 = vmatpush1.msra.mxu0 0.0
    %802 = vmatprep.mubr.f32.mxu0 0.0
    %803 = vmatmul.mubr.f32.gmra.mrb[0].mxu0 %v727
    %v804 = vpop.f32.mrb[0].mxu0
    %v805 = vadd.f32 0.0, %v804
    %v806 = vpop.f32.mrb[0].mxu0
    %807 = vmatprep.mubr.f32.mxu0 0.0
    %808 = vmatmul.mubr.f32.gmra.mrb[0].mxu0 %v730
    %v809 = vpop.f32.mrb[0].mxu0
    %v810 = vadd.f32 0.0, %v809
    %v811 = vpop.f32.mrb[0].mxu0
    %812 = vmatprep.mubr.f32.mxu0 0.0
    %813 = vmatmul.mubr.f32.gmra.mrb[0].mxu0 %v733
    %v814 = vpop.f32.mrb[0].mxu0
    %v815 = vadd.f32 0.0, %v814
    %v816 = vpop.f32.mrb[0].mxu0
    %817 = vmatprep.mubr.f32.mxu0 0.0
    %818 = vmatmul.mubr.f32.gmra.mrb[0].mxu0 %v736
    %v819 = vpop.f32.mrb[0].mxu0
    %v820 = vadd.f32 0.0, %v819
    %v821 = vpop.f32.mrb[0].mxu0
    %822 = vdwg.mxu0
    %v823 = vadd.f32 %v722, %v805
    %v824 = vadd.f32 %v723, %v810
    %v825 = vadd.f32 %v724, %v815
    %v826 = vadd.f32 %v725, %v820
    %v827 = vmax.f32 %v823, 0.0
    %v828 = vmax.f32 %v824, 0.0
    %v829 = vmax.f32 %v825, 0.0
    %v830 = vmax.f32 %v826, 0.0
    %v831 = vpack.c.bf16 %v828, %v827
    %v832 = vpack.c.bf16 %v830, %v829
    %v833 = vld [vmem:[%s8] sm:$0xf]
    %v834 = vld [vmem:[%s8 + $0x4] sm:$0xf]
    %v835 = vld [vmem:[%s8 + $0x8] sm:$0xf]
    %v836 = vld [vmem:[%s8 + $0xc] sm:$0xf]
    %v837 = vld [vmem:[%s9] sm:$0xff]
    %v838 = vld [vmem:[%s9 + $0x8] sm:$0xff]
    %v839 = vld [vmem:[%s9 + $0x10] sm:$0xff]
    %v840 = vld [vmem:[%s9 + $0x18] sm:$0xff]
    %842 = vset.pattern.permute.xlu0 0
    %843 = vperm.xlu0 %842, %v837
    %v844 = vpop.permute.xlu0 %843
    %847 = vset.pattern.permute.xlu0 0
    %848 = vperm.xlu0 %847, %v838
    %v849 = vpop.permute.xlu0 %848
    %852 = vset.pattern.permute.xlu0 0
    %853 = vperm.xlu0 %852, %v839
    %v854 = vpop.permute.xlu0 %853
    %857 = vset.pattern.permute.xlu0 0
    %858 = vperm.xlu0 %857, %v840
    %v859 = vpop.permute.xlu0 %858
    %v865 = vunpack.c.l.b16 %v833
    %v866 = vunpack.c.l.b16 %v834
    %v867 = vunpack.c.l.b16 %v835
    %v868 = vunpack.c.l.b16 %v836
    %v869 = vpack.c.b16 %v866, %v865
    %v870 = vpack.c.b16 %v868, %v867
    %v872 = vsel %vm124, %v869, 0
    %v875 = vsel %vm124, %v870, 0
    %877 = vmatprep.subr.bf16.mxu0 0
    %878 = vmatpush1.bf16.msra.mxu0 %v831
    %879 = vmatprep.subr.bf16.mxu0 0
    %880 = vmatpush1.bf16.msra.mxu0 %v832
    %881 = vmatprep.subr.bf16.mxu0 0
    %882 = vmatpush1.bf16.msra.mxu0 0
    %883 = vmatprep.subr.bf16.mxu0 0
    %884 = vmatpush1.bf16.msra.mxu0 0
    %885 = vmatprep.subr.bf16.mxu0 0
    %886 = vmatpush1.bf16.msra.mxu0 0
    %887 = vmatprep.subr.bf16.mxu0 0
    %888 = vmatpush1.bf16.msra.mxu0 0
    %889 = vmatprep.subr.bf16.mxu0 0
    %890 = vmatpush1.bf16.msra.mxu0 0
    %891 = vmatprep.subr.bf16.mxu0 0
    %892 = vmatpush1.bf16.msra.mxu0 0
    %893 = vmatprep.subr.bf16.mxu0 0
    %894 = vmatpush1.bf16.msra.mxu0 0
    %895 = vmatprep.subr.bf16.mxu0 0
    %896 = vmatpush1.bf16.msra.mxu0 0
    %897 = vmatprep.subr.bf16.mxu0 0
    %898 = vmatpush1.bf16.msra.mxu0 0
    %899 = vmatprep.subr.bf16.mxu0 0
    %900 = vmatpush1.bf16.msra.mxu0 0
    %901 = vmatprep.subr.bf16.mxu0 0
    %902 = vmatpush1.bf16.msra.mxu0 0
    %903 = vmatprep.subr.bf16.mxu0 0
    %904 = vmatpush1.bf16.msra.mxu0 0
    %905 = vmatprep.subr.bf16.mxu0 0
    %906 = vmatpush1.bf16.msra.mxu0 0
    %907 = vmatprep.subr.bf16.mxu0 0
    %908 = vmatpush1.bf16.msra.mxu0 0
    %909 = vmatprep.mubr.bf16.mxu0 0
    %910 = vmatmul.mubr.bf16.gmra.mrb[0].mxu0 %v872
    %v911 = vpop.f32.mrb[0].mxu0
    %v912 = vadd.f32 %v844, %v911
    %v913 = vpop.f32.mrb[0].mxu0
    %v914 = vpop.f32.mrb[0].mxu0
    %v915 = vadd.f32 %v849, %v914
    %v916 = vpop.f32.mrb[0].mxu0
    %917 = vmatprep.mubr.bf16.mxu0 0
    %918 = vmatmul.mubr.bf16.gmra.mrb[0].mxu0 %v875
    %v919 = vpop.f32.mrb[0].mxu0
    %v920 = vadd.f32 %v854, %v919
    %v921 = vpop.f32.mrb[0].mxu0
    %v922 = vpop.f32.mrb[0].mxu0
    %v923 = vadd.f32 %v859, %v922
    %v924 = vpop.f32.mrb[0].mxu0
    %925 = vdwg.mxu0
    %v926 = vld [vmem:[%s10] sm:$0xff]
    %v927 = vld [vmem:[%s10 + $0x8] sm:$0xff]
    %v928 = vld [vmem:[%s10 + $0x10] sm:$0xff]
    %v929 = vld [vmem:[%s10 + $0x18] sm:$0xff]
    %v930 = vld [vmem:[%s11] sm:$0xff]
    %v931 = vld [vmem:[%s11 + $0x8] sm:$0xff]
    %v932 = vld [vmem:[%s11 + $0x10] sm:$0xff]
    %v933 = vld [vmem:[%s11 + $0x18] sm:$0xff]
    %934 = vmatprep.subr.mxu0 0.0
    %935 = vmatpush1.msra.mxu0 %v49
    %936 = vmatprep.subr.mxu0 0.0
    %937 = vmatpush1.msra.mxu0 %v50
    %938 = vmatprep.subr.mxu0 0.0
    %939 = vmatpush1.msra.mxu0 %v51
    %940 = vmatprep.subr.mxu0 0.0
    %941 = vmatpush1.msra.mxu0 %v52
    %942 = vmatprep.subr.mxu0 0.0
    %943 = vmatpush1.msra.mxu0 %v53
    %944 = vmatprep.subr.mxu0 0.0
    %945 = vmatpush1.msra.mxu0 %v54
    %946 = vmatprep.subr.mxu0 0.0
    %947 = vmatpush1.msra.mxu0 %v55
    %948 = vmatprep.subr.mxu0 0.0
    %949 = vmatpush1.msra.mxu0 %v56
    %950 = vmatprep.subr.mxu0 0.0
    %951 = vmatpush1.msra.mxu0 %v57
    %952 = vmatprep.subr.mxu0 0.0
    %953 = vmatpush1.msra.mxu0 %v58
    %954 = vmatprep.subr.mxu0 0.0
    %955 = vmatpush1.msra.mxu0 %v59
    %956 = vmatprep.subr.mxu0 0.0
    %957 = vmatpush1.msra.mxu0 %v60
    %958 = vmatprep.subr.mxu0 0.0
    %959 = vmatpush1.msra.mxu0 %v61
    %960 = vmatprep.subr.mxu0 0.0
    %961 = vmatpush1.msra.mxu0 %v62
    %962 = vmatprep.subr.mxu0 0.0
    %963 = vmatpush1.msra.mxu0 %v63
    %964 = vmatprep.subr.mxu0 0.0
    %965 = vmatpush1.msra.mxu0 %v64
    %966 = vmatprep.subr.mxu0 0.0
    %967 = vmatpush1.msra.mxu0 0.0
    %968 = vmatprep.subr.mxu0 0.0
    %969 = vmatpush1.msra.mxu0 0.0
    %970 = vmatprep.subr.mxu0 0.0
    %971 = vmatpush1.msra.mxu0 0.0
    %972 = vmatprep.subr.mxu0 0.0
    %973 = vmatpush1.msra.mxu0 0.0
    %974 = vmatprep.subr.mxu0 0.0
    %975 = vmatpush1.msra.mxu0 0.0
    %976 = vmatprep.subr.mxu0 0.0
    %977 = vmatpush1.msra.mxu0 0.0
    %978 = vmatprep.subr.mxu0 0.0
    %979 = vmatpush1.msra.mxu0 0.0
    %980 = vmatprep.subr.mxu0 0.0
    %981 = vmatpush1.msra.mxu0 0.0
    %982 = vmatprep.subr.mxu0 0.0
    %983 = vmatpush1.msra.mxu0 0.0
    %984 = vmatprep.subr.mxu0 0.0
    %985 = vmatpush1.msra.mxu0 0.0
    %986 = vmatprep.subr.mxu0 0.0
    %987 = vmatpush1.msra.mxu0 0.0
    %988 = vmatprep.subr.mxu0 0.0
    %989 = vmatpush1.msra.mxu0 0.0
    %990 = vmatprep.subr.mxu0 0.0
    %991 = vmatpush1.msra.mxu0 0.0
    %992 = vmatprep.subr.mxu0 0.0
    %993 = vmatpush1.msra.mxu0 0.0
    %994 = vmatprep.subr.mxu0 0.0
    %995 = vmatpush1.msra.mxu0 0.0
    %996 = vmatprep.subr.mxu0 0.0
    %997 = vmatpush1.msra.mxu0 0.0
    %998 = vmatprep.mubr.f32.mxu0 0.0
    %999 = vmatmul.mubr.f32.gmra.mrb[0].mxu0 %v912
    %v1000 = vpop.f32.mrb[0].mxu0
    %v1001 = vadd.f32 0.0, %v1000
    %v1002 = vpop.f32.mrb[0].mxu0
    %1003 = vmatprep.mubr.f32.mxu0 0.0
    %1004 = vmatmul.mubr.f32.gmra.mrb[0].mxu0 %v915
    %v1005 = vpop.f32.mrb[0].mxu0
    %v1006 = vadd.f32 0.0, %v1005
    %v1007 = vpop.f32.mrb[0].mxu0
    %1008 = vmatprep.mubr.f32.mxu0 0.0
    %1009 = vmatmul.mubr.f32.gmra.mrb[0].mxu0 %v920
    %v1010 = vpop.f32.mrb[0].mxu0
    %v1011 = vadd.f32 0.0, %v1010
    %v1012 = vpop.f32.mrb[0].mxu0
    %1013 = vmatprep.mubr.f32.mxu0 0.0
    %1014 = vmatmul.mubr.f32.gmra.mrb[0].mxu0 %v923
    %v1015 = vpop.f32.mrb[0].mxu0
    %v1016 = vadd.f32 0.0, %v1015
    %v1017 = vpop.f32.mrb[0].mxu0
    %1018 = vdwg.mxu0
    %v1019 = vmul.f32 %v912, %v912
    %v1020 = vmul.f32 %v915, %v915
    %v1021 = vmul.f32 %v920, %v920
    %v1022 = vmul.f32 %v923, %v923
    %1023 = vmatprep.subr.mxu0 0.0
    %1024 = vmatpush1.msra.mxu0 %v49
    %1025 = vmatprep.subr.mxu0 0.0
    %1026 = vmatpush1.msra.mxu0 %v50
    %1027 = vmatprep.subr.mxu0 0.0
    %1028 = vmatpush1.msra.mxu0 %v51
    %1029 = vmatprep.subr.mxu0 0.0
    %1030 = vmatpush1.msra.mxu0 %v52
    %1031 = vmatprep.subr.mxu0 0.0
    %1032 = vmatpush1.msra.mxu0 %v53
    %1033 = vmatprep.subr.mxu0 0.0
    %1034 = vmatpush1.msra.mxu0 %v54
    %1035 = vmatprep.subr.mxu0 0.0
    %1036 = vmatpush1.msra.mxu0 %v55
    %1037 = vmatprep.subr.mxu0 0.0
    %1038 = vmatpush1.msra.mxu0 %v56
    %1039 = vmatprep.subr.mxu0 0.0
    %1040 = vmatpush1.msra.mxu0 %v57
    %1041 = vmatprep.subr.mxu0 0.0
    %1042 = vmatpush1.msra.mxu0 %v58
    %1043 = vmatprep.subr.mxu0 0.0
    %1044 = vmatpush1.msra.mxu0 %v59
    %1045 = vmatprep.subr.mxu0 0.0
    %1046 = vmatpush1.msra.mxu0 %v60
    %1047 = vmatprep.subr.mxu0 0.0
    %1048 = vmatpush1.msra.mxu0 %v61
    %1049 = vmatprep.subr.mxu0 0.0
    %1050 = vmatpush1.msra.mxu0 %v62
    %1051 = vmatprep.subr.mxu0 0.0
    %1052 = vmatpush1.msra.mxu0 %v63
    %1053 = vmatprep.subr.mxu0 0.0
    %1054 = vmatpush1.msra.mxu0 %v64
    %1055 = vmatprep.subr.mxu0 0.0
    %1056 = vmatpush1.msra.mxu0 0.0
    %1057 = vmatprep.subr.mxu0 0.0
    %1058 = vmatpush1.msra.mxu0 0.0
    %1059 = vmatprep.subr.mxu0 0.0
    %1060 = vmatpush1.msra.mxu0 0.0
    %1061 = vmatprep.subr.mxu0 0.0
    %1062 = vmatpush1.msra.mxu0 0.0
    %1063 = vmatprep.subr.mxu0 0.0
    %1064 = vmatpush1.msra.mxu0 0.0
    %1065 = vmatprep.subr.mxu0 0.0
    %1066 = vmatpush1.msra.mxu0 0.0
    %1067 = vmatprep.subr.mxu0 0.0
    %1068 = vmatpush1.msra.mxu0 0.0
    %1069 = vmatprep.subr.mxu0 0.0
    %1070 = vmatpush1.msra.mxu0 0.0
    %1071 = vmatprep.subr.mxu0 0.0
    %1072 = vmatpush1.msra.mxu0 0.0
    %1073 = vmatprep.subr.mxu0 0.0
    %1074 = vmatpush1.msra.mxu0 0.0
    %1075 = vmatprep.subr.mxu0 0.0
    %1076 = vmatpush1.msra.mxu0 0.0
    %1077 = vmatprep.subr.mxu0 0.0
    %1078 = vmatpush1.msra.mxu0 0.0
    %1079 = vmatprep.subr.mxu0 0.0
    %1080 = vmatpush1.msra.mxu0 0.0
    %1081 = vmatprep.subr.mxu0 0.0
    %1082 = vmatpush1.msra.mxu0 0.0
    %1083 = vmatprep.subr.mxu0 0.0
    %1084 = vmatpush1.msra.mxu0 0.0
    %1085 = vmatprep.subr.mxu0 0.0
    %1086 = vmatpush1.msra.mxu0 0.0
    %1087 = vmatprep.mubr.f32.mxu0 0.0
    %1088 = vmatmul.mubr.f32.gmra.mrb[0].mxu0 %v1019
    %v1089 = vpop.f32.mrb[0].mxu0
    %v1090 = vadd.f32 0.0, %v1089
    %v1091 = vpop.f32.mrb[0].mxu0
    %1092 = vmatprep.mubr.f32.mxu0 0.0
    %1093 = vmatmul.mubr.f32.gmra.mrb[0].mxu0 %v1020
    %v1094 = vpop.f32.mrb[0].mxu0
    %v1095 = vadd.f32 0.0, %v1094
    %v1096 = vpop.f32.mrb[0].mxu0
    %1097 = vmatprep.mubr.f32.mxu0 0.0
    %1098 = vmatmul.mubr.f32.gmra.mrb[0].mxu0 %v1021
    %v1099 = vpop.f32.mrb[0].mxu0
    %v1100 = vadd.f32 0.0, %v1099
    %v1101 = vpop.f32.mrb[0].mxu0
    %1102 = vmatprep.mubr.f32.mxu0 0.0
    %1103 = vmatmul.mubr.f32.gmra.mrb[0].mxu0 %v1022
    %v1104 = vpop.f32.mrb[0].mxu0
    %v1105 = vadd.f32 0.0, %v1104
    %v1106 = vpop.f32.mrb[0].mxu0
    %1107 = vdwg.mxu0
    %1108 = vmatprep.subr.mxu0 0.0
    %1109 = vmatpush1.msra.mxu0 %v1001
    %1110 = vmatprep.subr.mxu0 0.0
    %1111 = vmatpush1.msra.mxu0 %v1006
    %1112 = vmatprep.subr.mxu0 0.0
    %1113 = vmatpush1.msra.mxu0 %v1011
    %1114 = vmatprep.subr.mxu0 0.0
    %1115 = vmatpush1.msra.mxu0 %v1016
    %1116 = vmatprep.subr.mxu0 0.0
    %1117 = vmatpush1.msra.mxu0 0.0
    %1118 = vmatprep.subr.mxu0 0.0
    %1119 = vmatpush1.msra.mxu0 0.0
    %1120 = vmatprep.subr.mxu0 0.0
    %1121 = vmatpush1.msra.mxu0 0.0
    %1122 = vmatprep.subr.mxu0 0.0
    %1123 = vmatpush1.msra.mxu0 0.0
    %1124 = vmatprep.subr.mxu0 0.0
    %1125 = vmatpush1.msra.mxu0 0.0
    %1126 = vmatprep.subr.mxu0 0.0
    %1127 = vmatpush1.msra.mxu0 0.0
    %1128 = vmatprep.subr.mxu0 0.0
    %1129 = vmatpush1.msra.mxu0 0.0
    %1130 = vmatprep.subr.mxu0 0.0
    %1131 = vmatpush1.msra.mxu0 0.0
    %1132 = vmatprep.subr.mxu0 0.0
    %1133 = vmatpush1.msra.mxu0 0.0
    %1134 = vmatprep.subr.mxu0 0.0
    %1135 = vmatpush1.msra.mxu0 0.0
    %1136 = vmatprep.subr.mxu0 0.0
    %1137 = vmatpush1.msra.mxu0 0.0
    %1138 = vmatprep.subr.mxu0 0.0
    %1139 = vmatpush1.msra.mxu0 0.0
    %1140 = vmatprep.subr.mxu0 0.0
    %1141 = vmatpush1.msra.mxu0 0.0
    %1142 = vmatprep.subr.mxu0 0.0
    %1143 = vmatpush1.msra.mxu0 0.0
    %1144 = vmatprep.subr.mxu0 0.0
    %1145 = vmatpush1.msra.mxu0 0.0
    %1146 = vmatprep.subr.mxu0 0.0
    %1147 = vmatpush1.msra.mxu0 0.0
    %1148 = vmatprep.subr.mxu0 0.0
    %1149 = vmatpush1.msra.mxu0 0.0
    %1150 = vmatprep.subr.mxu0 0.0
    %1151 = vmatpush1.msra.mxu0 0.0
    %1152 = vmatprep.subr.mxu0 0.0
    %1153 = vmatpush1.msra.mxu0 0.0
    %1154 = vmatprep.subr.mxu0 0.0
    %1155 = vmatpush1.msra.mxu0 0.0
    %1156 = vmatprep.subr.mxu0 0.0
    %1157 = vmatpush1.msra.mxu0 0.0
    %1158 = vmatprep.subr.mxu0 0.0
    %1159 = vmatpush1.msra.mxu0 0.0
    %1160 = vmatprep.subr.mxu0 0.0
    %1161 = vmatpush1.msra.mxu0 0.0
    %1162 = vmatprep.subr.mxu0 0.0
    %1163 = vmatpush1.msra.mxu0 0.0
    %1164 = vmatprep.subr.mxu0 0.0
    %1165 = vmatpush1.msra.mxu0 0.0
    %1166 = vmatprep.subr.mxu0 0.0
    %1167 = vmatpush1.msra.mxu0 0.0
    %1168 = vmatprep.subr.mxu0 0.0
    %1169 = vmatpush1.msra.mxu0 0.0
    %1170 = vmatprep.subr.mxu0 0.0
    %1171 = vmatpush1.msra.mxu0 0.0
    %1172 = vmatprep.mubr.f32.mxu0 0.0
    %1173 = vmatmul.mubr.f32.gmra.mrb[0].mxu0 %v363
    %v1174 = vpop.f32.mrb[0].mxu0
    %v1175 = vadd.f32 0.0, %v1174
    %v1176 = vpop.f32.mrb[0].mxu0
    %1177 = vmatprep.mubr.f32.mxu0 0.0
    %1178 = vmatmul.mubr.f32.gmra.mrb[0].mxu0 %v366
    %v1179 = vpop.f32.mrb[0].mxu0
    %v1180 = vadd.f32 0.0, %v1179
    %v1181 = vpop.f32.mrb[0].mxu0
    %1182 = vmatprep.mubr.f32.mxu0 0.0
    %1183 = vmatmul.mubr.f32.gmra.mrb[0].mxu0 %v369
    %v1184 = vpop.f32.mrb[0].mxu0
    %v1185 = vadd.f32 0.0, %v1184
    %v1186 = vpop.f32.mrb[0].mxu0
    %1187 = vmatprep.mubr.f32.mxu0 0.0
    %1188 = vmatmul.mubr.f32.gmra.mrb[0].mxu0 %v372
    %v1189 = vpop.f32.mrb[0].mxu0
    %v1190 = vadd.f32 0.0, %v1189
    %v1191 = vpop.f32.mrb[0].mxu0
    %1192 = vdwg.mxu0
    %v1193 = vmul.f32 %v1175, 0.03125
    %v1194 = vmul.f32 %v1180, 0.03125
    %v1195 = vmul.f32 %v1185, 0.03125
    %v1196 = vmul.f32 %v1190, 0.03125
    %1197 = vmatprep.subr.mxu0 0.0
    %1198 = vmatpush1.msra.mxu0 %v1090
    %1199 = vmatprep.subr.mxu0 0.0
    %1200 = vmatpush1.msra.mxu0 %v1095
    %1201 = vmatprep.subr.mxu0 0.0
    %1202 = vmatpush1.msra.mxu0 %v1100
    %1203 = vmatprep.subr.mxu0 0.0
    %1204 = vmatpush1.msra.mxu0 %v1105
    %1205 = vmatprep.subr.mxu0 0.0
    %1206 = vmatpush1.msra.mxu0 0.0
    %1207 = vmatprep.subr.mxu0 0.0
    %1208 = vmatpush1.msra.mxu0 0.0
    %1209 = vmatprep.subr.mxu0 0.0
    %1210 = vmatpush1.msra.mxu0 0.0
    %1211 = vmatprep.subr.mxu0 0.0
    %1212 = vmatpush1.msra.mxu0 0.0
    %1213 = vmatprep.subr.mxu0 0.0
    %1214 = vmatpush1.msra.mxu0 0.0
    %1215 = vmatprep.subr.mxu0 0.0
    %1216 = vmatpush1.msra.mxu0 0.0
    %1217 = vmatprep.subr.mxu0 0.0
    %1218 = vmatpush1.msra.mxu0 0.0
    %1219 = vmatprep.subr.mxu0 0.0
    %1220 = vmatpush1.msra.mxu0 0.0
    %1221 = vmatprep.subr.mxu0 0.0
    %1222 = vmatpush1.msra.mxu0 0.0
    %1223 = vmatprep.subr.mxu0 0.0
    %1224 = vmatpush1.msra.mxu0 0.0
    %1225 = vmatprep.subr.mxu0 0.0
    %1226 = vmatpush1.msra.mxu0 0.0
    %1227 = vmatprep.subr.mxu0 0.0
    %1228 = vmatpush1.msra.mxu0 0.0
    %1229 = vmatprep.subr.mxu0 0.0
    %1230 = vmatpush1.msra.mxu0 0.0
    %1231 = vmatprep.subr.mxu0 0.0
    %1232 = vmatpush1.msra.mxu0 0.0
    %1233 = vmatprep.subr.mxu0 0.0
    %1234 = vmatpush1.msra.mxu0 0.0
    %1235 = vmatprep.subr.mxu0 0.0
    %1236 = vmatpush1.msra.mxu0 0.0
    %1237 = vmatprep.subr.mxu0 0.0
    %1238 = vmatpush1.msra.mxu0 0.0
    %1239 = vmatprep.subr.mxu0 0.0
    %1240 = vmatpush1.msra.mxu0 0.0
    %1241 = vmatprep.subr.mxu0 0.0
    %1242 = vmatpush1.msra.mxu0 0.0
    %1243 = vmatprep.subr.mxu0 0.0
    %1244 = vmatpush1.msra.mxu0 0.0
    %1245 = vmatprep.subr.mxu0 0.0
    %1246 = vmatpush1.msra.mxu0 0.0
    %1247 = vmatprep.subr.mxu0 0.0
    %1248 = vmatpush1.msra.mxu0 0.0
    %1249 = vmatprep.subr.mxu0 0.0
    %1250 = vmatpush1.msra.mxu0 0.0
    %1251 = vmatprep.subr.mxu0 0.0
    %1252 = vmatpush1.msra.mxu0 0.0
    %1253 = vmatprep.subr.mxu0 0.0
    %1254 = vmatpush1.msra.mxu0 0.0
    %1255 = vmatprep.subr.mxu0 0.0
    %1256 = vmatpush1.msra.mxu0 0.0
    %1257 = vmatprep.subr.mxu0 0.0
    %1258 = vmatpush1.msra.mxu0 0.0
    %1259 = vmatprep.subr.mxu0 0.0
    %1260 = vmatpush1.msra.mxu0 0.0
    %1261 = vmatprep.mubr.f32.mxu0 0.0
    %1262 = vmatmul.mubr.f32.gmra.mrb[0].mxu0 %v363
    %v1263 = vpop.f32.mrb[0].mxu0
    %v1264 = vadd.f32 0.0, %v1263
    %v1265 = vpop.f32.mrb[0].mxu0
    %1266 = vmatprep.mubr.f32.mxu0 0.0
    %1267 = vmatmul.mubr.f32.gmra.mrb[0].mxu0 %v366
    %v1268 = vpop.f32.mrb[0].mxu0
    %v1269 = vadd.f32 0.0, %v1268
    %v1270 = vpop.f32.mrb[0].mxu0
    %1271 = vmatprep.mubr.f32.mxu0 0.0
    %1272 = vmatmul.mubr.f32.gmra.mrb[0].mxu0 %v369
    %v1273 = vpop.f32.mrb[0].mxu0
    %v1274 = vadd.f32 0.0, %v1273
    %v1275 = vpop.f32.mrb[0].mxu0
    %1276 = vmatprep.mubr.f32.mxu0 0.0
    %1277 = vmatmul.mubr.f32.gmra.mrb[0].mxu0 %v372
    %v1278 = vpop.f32.mrb[0].mxu0
    %v1279 = vadd.f32 0.0, %v1278
    %v1280 = vpop.f32.mrb[0].mxu0
    %1281 = vdwg.mxu0
    %v1282 = vmul.f32 %v1264, 0.03125
    %v1283 = vmul.f32 %v1269, 0.03125
    %v1284 = vmul.f32 %v1274, 0.03125
    %v1285 = vmul.f32 %v1279, 0.03125
    %v1286 = vmul.f32 %v1193, %v1193
    %v1287 = vmul.f32 %v1194, %v1194
    %v1288 = vmul.f32 %v1195, %v1195
    %v1289 = vmul.f32 %v1196, %v1196
    %v1290 = vsub.f32 %v1282, %v1286
    %v1291 = vsub.f32 %v1283, %v1287
    %v1292 = vsub.f32 %v1284, %v1288
    %v1293 = vsub.f32 %v1285, %v1289
    %v1294 = vmax.f32 %v1290, 0.0
    %v1295 = vmax.f32 %v1291, 0.0
    %v1296 = vmax.f32 %v1292, 0.0
    %v1297 = vmax.f32 %v1293, 0.0
    %v1298 = vadd.f32 %v1294, 1e-05
    %v1299 = vadd.f32 %v1295, 1e-05
    %v1300 = vadd.f32 %v1296, 1e-05
    %v1301 = vadd.f32 %v1297, 1e-05
    %v1302 = vrsqrt.pop %v1298
    %v1303 = vrsqrt.pop %v1299
    %v1304 = vrsqrt.pop %v1300
    %v1305 = vrsqrt.pop %v1301
    %1307 = vset.pattern.permute.xlu0 0
    %1308 = vperm.xlu0 %1307, %v926
    %v1309 = vpop.permute.xlu0 %1308
    %1312 = vset.pattern.permute.xlu0 0
    %1313 = vperm.xlu0 %1312, %v927
    %v1314 = vpop.permute.xlu0 %1313
    %1317 = vset.pattern.permute.xlu0 0
    %1318 = vperm.xlu0 %1317, %v928
    %v1319 = vpop.permute.xlu0 %1318
    %1322 = vset.pattern.permute.xlu0 0
    %1323 = vperm.xlu0 %1322, %v929
    %v1324 = vpop.permute.xlu0 %1323
    %v1326 = vmul.f32 %v1302, %v1309
    %v1327 = vmul.f32 %v1303, %v1314
    %v1328 = vmul.f32 %v1304, %v1319
    %v1329 = vmul.f32 %v1305, %v1324
    %v1330 = vmul.f32 %v1193, %v1326
    %v1331 = vmul.f32 %v1194, %v1327
    %v1332 = vmul.f32 %v1195, %v1328
    %v1333 = vmul.f32 %v1196, %v1329
    %1335 = vset.pattern.permute.xlu0 0
    %1336 = vperm.xlu0 %1335, %v930
    %v1337 = vpop.permute.xlu0 %1336
    %1340 = vset.pattern.permute.xlu0 0
    %1341 = vperm.xlu0 %1340, %v931
    %v1342 = vpop.permute.xlu0 %1341
    %1345 = vset.pattern.permute.xlu0 0
    %1346 = vperm.xlu0 %1345, %v932
    %v1347 = vpop.permute.xlu0 %1346
    %1350 = vset.pattern.permute.xlu0 0
    %1351 = vperm.xlu0 %1350, %v933
    %v1352 = vpop.permute.xlu0 %1351
    %v1354 = vsub.f32 %v1337, %v1330
    %v1355 = vsub.f32 %v1342, %v1331
    %v1356 = vsub.f32 %v1347, %v1332
    %v1357 = vsub.f32 %v1352, %v1333
    %v1359 = vsel %vm624, %v1326, 0
    %v1362 = vsel %vm624, %v1327, 0
    %v1365 = vsel %vm624, %v1328, 0
    %v1368 = vsel %vm624, %v1329, 0
    %1370 = vmatprep.subr.mxu0 0.0
    %1371 = vmatpush1.msra.mxu0 %v65
    %1372 = vmatprep.subr.mxu0 0.0
    %1373 = vmatpush1.msra.mxu0 0.0
    %1374 = vmatprep.subr.mxu0 0.0
    %1375 = vmatpush1.msra.mxu0 0.0
    %1376 = vmatprep.subr.mxu0 0.0
    %1377 = vmatpush1.msra.mxu0 0.0
    %1378 = vmatprep.subr.mxu0 0.0
    %1379 = vmatpush1.msra.mxu0 0.0
    %1380 = vmatprep.subr.mxu0 0.0
    %1381 = vmatpush1.msra.mxu0 0.0
    %1382 = vmatprep.subr.mxu0 0.0
    %1383 = vmatpush1.msra.mxu0 0.0
    %1384 = vmatprep.subr.mxu0 0.0
    %1385 = vmatpush1.msra.mxu0 0.0
    %1386 = vmatprep.subr.mxu0 0.0
    %1387 = vmatpush1.msra.mxu0 0.0
    %1388 = vmatprep.subr.mxu0 0.0
    %1389 = vmatpush1.msra.mxu0 0.0
    %1390 = vmatprep.subr.mxu0 0.0
    %1391 = vmatpush1.msra.mxu0 0.0
    %1392 = vmatprep.subr.mxu0 0.0
    %1393 = vmatpush1.msra.mxu0 0.0
    %1394 = vmatprep.subr.mxu0 0.0
    %1395 = vmatpush1.msra.mxu0 0.0
    %1396 = vmatprep.subr.mxu0 0.0
    %1397 = vmatpush1.msra.mxu0 0.0
    %1398 = vmatprep.subr.mxu0 0.0
    %1399 = vmatpush1.msra.mxu0 0.0
    %1400 = vmatprep.subr.mxu0 0.0
    %1401 = vmatpush1.msra.mxu0 0.0
    %1402 = vmatprep.subr.mxu0 0.0
    %1403 = vmatpush1.msra.mxu0 0.0
    %1404 = vmatprep.subr.mxu0 0.0
    %1405 = vmatpush1.msra.mxu0 0.0
    %1406 = vmatprep.subr.mxu0 0.0
    %1407 = vmatpush1.msra.mxu0 0.0
    %1408 = vmatprep.subr.mxu0 0.0
    %1409 = vmatpush1.msra.mxu0 0.0
    %1410 = vmatprep.subr.mxu0 0.0
    %1411 = vmatpush1.msra.mxu0 0.0
    %1412 = vmatprep.subr.mxu0 0.0
    %1413 = vmatpush1.msra.mxu0 0.0
    %1414 = vmatprep.subr.mxu0 0.0
    %1415 = vmatpush1.msra.mxu0 0.0
    %1416 = vmatprep.subr.mxu0 0.0
    %1417 = vmatpush1.msra.mxu0 0.0
    %1418 = vmatprep.subr.mxu0 0.0
    %1419 = vmatpush1.msra.mxu0 0.0
    %1420 = vmatprep.subr.mxu0 0.0
    %1421 = vmatpush1.msra.mxu0 0.0
    %1422 = vmatprep.subr.mxu0 0.0
    %1423 = vmatpush1.msra.mxu0 0.0
    %1424 = vmatprep.subr.mxu0 0.0
    %1425 = vmatpush1.msra.mxu0 0.0
    %1426 = vmatprep.subr.mxu0 0.0
    %1427 = vmatpush1.msra.mxu0 0.0
    %1428 = vmatprep.subr.mxu0 0.0
    %1429 = vmatpush1.msra.mxu0 0.0
    %1430 = vmatprep.subr.mxu0 0.0
    %1431 = vmatpush1.msra.mxu0 0.0
    %1432 = vmatprep.subr.mxu0 0.0
    %1433 = vmatpush1.msra.mxu0 0.0
    %1434 = vmatprep.mubr.f32.mxu0 0.0
    %1435 = vmatmul.mubr.f32.gmra.mrb[0].mxu0 %v1359
    %v1436 = vpop.f32.mrb[0].mxu0
    %v1437 = vadd.f32 0.0, %v1436
    %v1438 = vpop.f32.mrb[0].mxu0
    %1439 = vmatprep.mubr.f32.mxu0 0.0
    %1440 = vmatmul.mubr.f32.gmra.mrb[0].mxu0 %v1362
    %v1441 = vpop.f32.mrb[0].mxu0
    %v1442 = vadd.f32 0.0, %v1441
    %v1443 = vpop.f32.mrb[0].mxu0
    %1444 = vmatprep.mubr.f32.mxu0 0.0
    %1445 = vmatmul.mubr.f32.gmra.mrb[0].mxu0 %v1365
    %v1446 = vpop.f32.mrb[0].mxu0
    %v1447 = vadd.f32 0.0, %v1446
    %v1448 = vpop.f32.mrb[0].mxu0
    %1449 = vmatprep.mubr.f32.mxu0 0.0
    %1450 = vmatmul.mubr.f32.gmra.mrb[0].mxu0 %v1368
    %v1451 = vpop.f32.mrb[0].mxu0
    %v1452 = vadd.f32 0.0, %v1451
    %v1453 = vpop.f32.mrb[0].mxu0
    %1454 = vdwg.mxu0
    %v1455 = vmul.f32 %v912, %v1437
    %v1456 = vmul.f32 %v915, %v1442
    %v1457 = vmul.f32 %v920, %v1447
    %v1458 = vmul.f32 %v923, %v1452
    %v1460 = vsel %vm624, %v1354, 0
    %v1463 = vsel %vm624, %v1355, 0
    %v1466 = vsel %vm624, %v1356, 0
    %v1469 = vsel %vm624, %v1357, 0
    %1471 = vmatprep.subr.mxu0 0.0
    %1472 = vmatpush1.msra.mxu0 %v65
    %1473 = vmatprep.subr.mxu0 0.0
    %1474 = vmatpush1.msra.mxu0 0.0
    %1475 = vmatprep.subr.mxu0 0.0
    %1476 = vmatpush1.msra.mxu0 0.0
    %1477 = vmatprep.subr.mxu0 0.0
    %1478 = vmatpush1.msra.mxu0 0.0
    %1479 = vmatprep.subr.mxu0 0.0
    %1480 = vmatpush1.msra.mxu0 0.0
    %1481 = vmatprep.subr.mxu0 0.0
    %1482 = vmatpush1.msra.mxu0 0.0
    %1483 = vmatprep.subr.mxu0 0.0
    %1484 = vmatpush1.msra.mxu0 0.0
    %1485 = vmatprep.subr.mxu0 0.0
    %1486 = vmatpush1.msra.mxu0 0.0
    %1487 = vmatprep.subr.mxu0 0.0
    %1488 = vmatpush1.msra.mxu0 0.0
    %1489 = vmatprep.subr.mxu0 0.0
    %1490 = vmatpush1.msra.mxu0 0.0
    %1491 = vmatprep.subr.mxu0 0.0
    %1492 = vmatpush1.msra.mxu0 0.0
    %1493 = vmatprep.subr.mxu0 0.0
    %1494 = vmatpush1.msra.mxu0 0.0
    %1495 = vmatprep.subr.mxu0 0.0
    %1496 = vmatpush1.msra.mxu0 0.0
    %1497 = vmatprep.subr.mxu0 0.0
    %1498 = vmatpush1.msra.mxu0 0.0
    %1499 = vmatprep.subr.mxu0 0.0
    %1500 = vmatpush1.msra.mxu0 0.0
    %1501 = vmatprep.subr.mxu0 0.0
    %1502 = vmatpush1.msra.mxu0 0.0
    %1503 = vmatprep.subr.mxu0 0.0
    %1504 = vmatpush1.msra.mxu0 0.0
    %1505 = vmatprep.subr.mxu0 0.0
    %1506 = vmatpush1.msra.mxu0 0.0
    %1507 = vmatprep.subr.mxu0 0.0
    %1508 = vmatpush1.msra.mxu0 0.0
    %1509 = vmatprep.subr.mxu0 0.0
    %1510 = vmatpush1.msra.mxu0 0.0
    %1511 = vmatprep.subr.mxu0 0.0
    %1512 = vmatpush1.msra.mxu0 0.0
    %1513 = vmatprep.subr.mxu0 0.0
    %1514 = vmatpush1.msra.mxu0 0.0
    %1515 = vmatprep.subr.mxu0 0.0
    %1516 = vmatpush1.msra.mxu0 0.0
    %1517 = vmatprep.subr.mxu0 0.0
    %1518 = vmatpush1.msra.mxu0 0.0
    %1519 = vmatprep.subr.mxu0 0.0
    %1520 = vmatpush1.msra.mxu0 0.0
    %1521 = vmatprep.subr.mxu0 0.0
    %1522 = vmatpush1.msra.mxu0 0.0
    %1523 = vmatprep.subr.mxu0 0.0
    %1524 = vmatpush1.msra.mxu0 0.0
    %1525 = vmatprep.subr.mxu0 0.0
    %1526 = vmatpush1.msra.mxu0 0.0
    %1527 = vmatprep.subr.mxu0 0.0
    %1528 = vmatpush1.msra.mxu0 0.0
    %1529 = vmatprep.subr.mxu0 0.0
    %1530 = vmatpush1.msra.mxu0 0.0
    %1531 = vmatprep.subr.mxu0 0.0
    %1532 = vmatpush1.msra.mxu0 0.0
    %1533 = vmatprep.subr.mxu0 0.0
    %1534 = vmatpush1.msra.mxu0 0.0
    %1535 = vmatprep.mubr.f32.mxu0 0.0
    %1536 = vmatmul.mubr.f32.gmra.mrb[0].mxu0 %v1460
    %v1537 = vpop.f32.mrb[0].mxu0
    %v1538 = vadd.f32 0.0, %v1537
    %v1539 = vpop.f32.mrb[0].mxu0
    %1540 = vmatprep.mubr.f32.mxu0 0.0
    %1541 = vmatmul.mubr.f32.gmra.mrb[0].mxu0 %v1463
    %v1542 = vpop.f32.mrb[0].mxu0
    %v1543 = vadd.f32 0.0, %v1542
    %v1544 = vpop.f32.mrb[0].mxu0
    %1545 = vmatprep.mubr.f32.mxu0 0.0
    %1546 = vmatmul.mubr.f32.gmra.mrb[0].mxu0 %v1466
    %v1547 = vpop.f32.mrb[0].mxu0
    %v1548 = vadd.f32 0.0, %v1547
    %v1549 = vpop.f32.mrb[0].mxu0
    %1550 = vmatprep.mubr.f32.mxu0 0.0
    %1551 = vmatmul.mubr.f32.gmra.mrb[0].mxu0 %v1469
    %v1552 = vpop.f32.mrb[0].mxu0
    %v1553 = vadd.f32 0.0, %v1552
    %v1554 = vpop.f32.mrb[0].mxu0
    %1555 = vdwg.mxu0
    %v1556 = vadd.f32 %v1455, %v1538
    %v1557 = vadd.f32 %v1456, %v1543
    %v1558 = vadd.f32 %v1457, %v1548
    %v1559 = vadd.f32 %v1458, %v1553
    %v1560 = vmax.f32 %v1556, 0.0
    %v1561 = vmax.f32 %v1557, 0.0
    %v1562 = vmax.f32 %v1558, 0.0
    %v1563 = vmax.f32 %v1559, 0.0
    %v1564 = vpack.c.bf16 %v1561, %v1560
    %v1565 = vpack.c.bf16 %v1563, %v1562
    %v1566 = vld [vmem:[%s12] sm:$0xf]
    %v1567 = vld [vmem:[%s12 + $0x4] sm:$0xf]
    %v1568 = vld [vmem:[%s13] sm:$0xff]
    %v1569 = vld [vmem:[%s13 + $0x8] sm:$0xff]
    %1571 = vset.pattern.permute.xlu0 0
    %1572 = vperm.xlu0 %1571, %v1568
    %v1573 = vpop.permute.xlu0 %1572
    %1576 = vset.pattern.permute.xlu0 0
    %1577 = vperm.xlu0 %1576, %v1569
    %v1578 = vpop.permute.xlu0 %1577
    %v1582 = vunpack.c.l.b16 %v1566
    %v1583 = vunpack.c.l.b16 %v1567
    %v1584 = vpack.c.b16 %v1583, %v1582
    %v1586 = vsel %vm124, %v1584, 0
    %1588 = vmatprep.subr.bf16.mxu0 0
    %1589 = vmatpush1.bf16.msra.mxu0 %v1564
    %1590 = vmatprep.subr.bf16.mxu0 0
    %1591 = vmatpush1.bf16.msra.mxu0 %v1565
    %1592 = vmatprep.subr.bf16.mxu0 0
    %1593 = vmatpush1.bf16.msra.mxu0 0
    %1594 = vmatprep.subr.bf16.mxu0 0
    %1595 = vmatpush1.bf16.msra.mxu0 0
    %1596 = vmatprep.subr.bf16.mxu0 0
    %1597 = vmatpush1.bf16.msra.mxu0 0
    %1598 = vmatprep.subr.bf16.mxu0 0
    %1599 = vmatpush1.bf16.msra.mxu0 0
    %1600 = vmatprep.subr.bf16.mxu0 0
    %1601 = vmatpush1.bf16.msra.mxu0 0
    %1602 = vmatprep.subr.bf16.mxu0 0
    %1603 = vmatpush1.bf16.msra.mxu0 0
    %1604 = vmatprep.subr.bf16.mxu0 0
    %1605 = vmatpush1.bf16.msra.mxu0 0
    %1606 = vmatprep.subr.bf16.mxu0 0
    %1607 = vmatpush1.bf16.msra.mxu0 0
    %1608 = vmatprep.subr.bf16.mxu0 0
    %1609 = vmatpush1.bf16.msra.mxu0 0
    %1610 = vmatprep.subr.bf16.mxu0 0
    %1611 = vmatpush1.bf16.msra.mxu0 0
    %1612 = vmatprep.subr.bf16.mxu0 0
    %1613 = vmatpush1.bf16.msra.mxu0 0
    %1614 = vmatprep.subr.bf16.mxu0 0
    %1615 = vmatpush1.bf16.msra.mxu0 0
    %1616 = vmatprep.subr.bf16.mxu0 0
    %1617 = vmatpush1.bf16.msra.mxu0 0
    %1618 = vmatprep.subr.bf16.mxu0 0
    %1619 = vmatpush1.bf16.msra.mxu0 0
    %1620 = vmatprep.mubr.bf16.mxu0 0
    %1621 = vmatmul.mubr.bf16.gmra.mrb[0].mxu0 %v1586
    %v1622 = vpop.f32.mrb[0].mxu0
    %v1623 = vadd.f32 %v1573, %v1622
    %v1624 = vpop.f32.mrb[0].mxu0
    %v1625 = vpop.f32.mrb[0].mxu0
    %v1626 = vadd.f32 %v1578, %v1625
    %v1627 = vpop.f32.mrb[0].mxu0
    %1628 = vdwg.mxu0
    %1629 = vst [vmem:[#allocation2] sm:$0xff] %v1623
    %1630 = vst [vmem:[#allocation2 + $0x8] sm:$0xff] %v1626
    // Predicated region
    $region58: #{tpu_custom_call.1} parent=1 // pred_check
      _
    $region59: #{tpu_custom_call.1} parent=1 // pred_check_branch
      %1632 = sbr.rel (0) target = $region61
    $region60: #{tpu_custom_call.1} parent=1 // pred_region
      %s1634 = ssub.s32 256, 256
      %1635 = vsyncadd [#allocation3], %s1634
      %s1636 = sshll.u32 [#allocation2], 4
      %s1637 = int_to_ptr.vmem [resolvable:$true] %s1636
      %1642 = dma.vmem_to_hbm [thread:$0]  %s1637, 256, %s14, [#allocation3], 128, 128, 8
    $region61: #{tpu_custom_call.1} parent=1 // pred_fallthru
      _
    // Predicated region
    $region62: #{tpu_custom_call.1} parent=1 // pred_check
      _
    $region63: #{tpu_custom_call.1} parent=1 // pred_check_branch
      %1644 = sbr.rel (0) target = $region65
    $region64: #{tpu_custom_call.1} parent=1 // pred_region
      %1645 = dma.done [#allocation3], 256
    $region65: #{tpu_custom_call.1} parent=1 // pred_fallthru
      _
    %1646 = vsyncpa [#allocation3], 1

</llo_original>
